<compile_context>
chip_gen: v7x
topology: tpu7x:2x2x1
jax: 0.10.0
libtpu: 0.0.40
codegen_flags: <defaults>
</compile_context>

<pallas_src>
import functools

import jax
import jax.numpy as jnp
from jax import lax
from jax.experimental import pallas as pl
from jax.experimental.pallas import tpu as pltpu

EPS = 1e-5


# ------------------------------ fused stage kernel ------------------------------

def _make_stage_kernel(n_blocks, height, compute_dtype):
    """Builds the fused kernel for `n_blocks` chained stride-1 BasicBlocks.

    The x block arrives vertically zero-padded by 2*n_blocks rows on each side; every block
    consumes a 2-row halo per side, so block k (0-based) sees m_in = 2*(n_blocks-k) pad rows
    and emits m_in-2 pad rows (forced to exact zero), the last block emitting exactly
    `height` rows.
    """

    def one_block(x_cd, x32, w1, s1, b1, w2, s2, b2, m_in):
        r_in = height + 2 * m_in
        r_y = r_in - 2                      # intermediate rows (conv2's needed input rows)
        r_out = r_in - 4                    # this block's output rows
        m_out = m_in - 2

        # conv1 (3x3, pad=1) as 3 wide-K matmuls (banded block-diagonal weights fold the dx
        # taps, the width zero padding and the lane packing) + folded BN1 + ReLU; f32 acc.
        acc1 = jnp.dot(x_cd[0:r_y, :], w1[0], preferred_element_type=jnp.float32)
        for dy in (1, 2):
            acc1 = acc1 + jnp.dot(x_cd[dy:dy + r_y, :], w1[dy],
                                  preferred_element_type=jnp.float32)
        y = jnp.maximum(acc1 * s1[...] + b1[...], 0.0)
        # intermediate rows outside the image are conv2's vertical zero padding
        gy = lax.broadcasted_iota(jnp.int32, (r_y, 1), 0) - (m_in - 1)
        y = jnp.where((gy >= 0) & (gy < height), y, 0.0).astype(compute_dtype)

        # conv2 (3x3, pad=1) + folded BN2 + f32 identity add + ReLU.
        acc2 = jnp.dot(y[0:r_out, :], w2[0], preferred_element_type=jnp.float32)
        for dy in (1, 2):
            acc2 = acc2 + jnp.dot(y[dy:dy + r_out, :], w2[dy],
                                  preferred_element_type=jnp.float32)
        out = jnp.maximum(acc2 * s2[...] + b2[...] + x32[2:2 + r_out, :], 0.0)
        if m_out > 0:   # keep this block's pad rows exact zeros for the next block
            go = lax.broadcasted_iota(jnp.int32, (r_out, 1), 0) - m_out
            out = jnp.where((go >= 0) & (go < height), out, 0.0)
        return out

    def kernel(x_ref, *refs):
        o_ref = refs[-1]
        params = refs[:-1]                              # 6 refs per block
        cur_cd = x_ref[0]                               # (H + 4*n_blocks, L), MXU dtype
        cur32 = cur_cd.astype(jnp.float32)              # f32 residual / identity path
        for k in range(n_blocks):
            w1, s1, b1, w2, s2, b2 = params[6 * k:6 * k + 6]
            cur32 = one_block(cur_cd, cur32, w1, s1, b1, w2, s2, b2,
                              m_in=2 * (n_blocks - k))
            if k + 1 < n_blocks:
                cur_cd = cur32.astype(compute_dtype)
        o_ref[0] = cur32.astype(o_ref.dtype)

    return kernel


# ------------------------------ parameter preparation (hoisted, once per model) ---------

def _fold_bn(gamma, beta, mean, var):
    scale = gamma / jnp.sqrt(var + EPS)
    return scale, beta - mean * scale


def _banded_block_diag_weight(w_hwio, width, lane_pack):
    """(3,3,Cin,Cout) HWIO -> (3, P*W*Cin, P*W*Cout) banded block-diagonal per-dy weights.

    band[dy, wi*Cin+ci, x*Cout+co] = w[dy, wi-x+1, ci, co] for |wi - x| <= 1, zero
    elsewhere; multiplying a width-flattened activation row by it performs the dx taps AND
    the width zero padding of the 3x3 conv with no shifted slices inside the kernel. The
    P-fold block diagonal lets `lane_pack` images share the lane axis without mixing.
    """
    cin, cout = w_hwio.shape[2], w_hwio.shape[3]
    wi = jnp.arange(width)[None, :, None]
    xo = jnp.arange(width)[None, None, :]
    dx = jnp.arange(3)[:, None, None]
    sel = (wi == xo + dx - 1).astype(w_hwio.dtype)
    band = jnp.einsum("apq,daio->dpiqo", sel, w_hwio).reshape(3, width * cin, width * cout)
    eye = jnp.eye(lane_pack, dtype=w_hwio.dtype)
    bd = jnp.einsum("uv,dkn->dukvn", eye, band)
    return bd.reshape(3, lane_pack * width * cin, lane_pack * width * cout)


def prepare_stage_params(block_params, *, width, lane_pack, compute_dtype):
    """Fold BN and build banded block-diagonal weights ONCE per model (these O(W^2*C^2)
    einsums must not re-run inside the jitted forward on every call)."""
    prepared = []
    for p in block_params:
        cin, cout = p["w1"].shape[2], p["w2"].shape[3]
        assert cin == cout, "stride-1 / downsample=None block requires inplanes == planes"
        s1, b1 = _fold_bn(p["bn1_gamma"], p["bn1_beta"], p["bn1_mean"], p["bn1_var"])
        s2, b2 = _fold_bn(p["bn2_gamma"], p["bn2_beta"], p["bn2_mean"], p["bn2_var"])
        prepared += [
            _banded_block_diag_weight(p["w1"], width, lane_pack).astype(compute_dtype),
            jnp.tile(s1, width * lane_pack).reshape(1, -1).astype(jnp.float32),
            jnp.tile(b1, width * lane_pack).reshape(1, -1).astype(jnp.float32),
            _banded_block_diag_weight(p["w2"], width, lane_pack).astype(compute_dtype),
            jnp.tile(s2, width * lane_pack).reshape(1, -1).astype(jnp.float32),
            jnp.tile(b2, width * lane_pack).reshape(1, -1).astype(jnp.float32),
        ]
    return tuple(prepared)


def pick_lane_pack(batch, flat_width, target_lanes=128):
    """Largest divisor of batch whose lane packing reaches ~target_lanes lanes."""
    p = min(max(1, target_lanes // flat_width), batch)
    while batch % p:
        p -= 1
    return p


# ------------------------------ wrapper ------------------------------

def audio_visual_resnet_stage_forward(x_nchw, prepared_params, *, n_blocks, lane_pack,
                                      compute_dtype):
    """A stride-1 residual stage of AudioVisualResNet (e.g. layer1 = 2 BasicBlocks), run as
    a single fused Pallas kernel over the whole stage."""
    # TODO(synk): the AudInitStage/VisInitStage stem (7x7 / 1x9 conv + BN + ReLU + maxpool),
    # the stride-2 stages with their 1x1-conv downsample branch, and the final
    # AdaptiveAvgPool2d of AudioVisualResNet are not implemented here; only the stride-1 /
    # downsample=None BasicBlock stages are covered.
    batch, chan, height, width = x_nchw.shape
    assert batch % lane_pack == 0
    groups = batch // lane_pack
    lanes = lane_pack * width * chan
    halo = 2 * n_blocks

    # NCHW -> lane-packed (groups, H, lane_pack*W*C) with a zero-row vertical halo, all in
    # one materializing layout transform (XLA fuses the pad into the transpose copy).
    x = jnp.transpose(x_nchw, (0, 2, 3, 1)).reshape(groups, lane_pack, height, width * chan)
    x = jnp.transpose(x, (0, 2, 1, 3)).reshape(groups, height, lanes)
    x = jnp.pad(x, ((0, 0), (halo, halo), (0, 0))).astype(compute_dtype)

    in_specs = [pl.BlockSpec((1, height + 2 * halo, lanes), lambda g: (g, 0, 0))]
    for _ in range(n_blocks):
        in_specs += [
            pl.BlockSpec((3, lanes, lanes), lambda g: (0, 0, 0)),
            pl.BlockSpec((1, lanes), lambda g: (0, 0)),
            pl.BlockSpec((1, lanes), lambda g: (0, 0)),
            pl.BlockSpec((3, lanes, lanes), lambda g: (0, 0, 0)),
            pl.BlockSpec((1, lanes), lambda g: (0, 0)),
            pl.BlockSpec((1, lanes), lambda g: (0, 0)),
        ]

    out = pl.pallas_call(
        _make_stage_kernel(n_blocks, height, compute_dtype),
        out_shape=jax.ShapeDtypeStruct((groups, height, lanes), x_nchw.dtype),
        grid=(groups,),
        in_specs=in_specs,
        out_specs=pl.BlockSpec((1, height, lanes), lambda g: (g, 0, 0)),
        compiler_params=pltpu.CompilerParams(
            # batch-group axis -> megacore-parallel (v7x); with batch >= 4 pick lane_pack so
            # groups >= 2 to keep both v7x TensorCores busy.
            dimension_semantics=("parallel",),
            vmem_limit_bytes=32 * 1024 * 1024,
        ),
    )(x, *prepared_params)

    # un-pack lanes: (groups, H, P*W*C) -> NCHW
    out = out.reshape(groups, height, lane_pack, width * chan)
    out = jnp.transpose(out, (0, 2, 1, 3)).reshape(batch, height, width, chan)
    return jnp.transpose(out, (0, 3, 1, 2))


# ------------------------------ pure-JAX reference ------------------------------

def _ref_stage_forward(x_nchw, block_params):
    x = jnp.transpose(x_nchw, (0, 2, 3, 1))
    dn = lax.conv_dimension_numbers(x.shape, block_params[0]["w1"].shape,
                                    ("NHWC", "HWIO", "NHWC"))

    def conv(inp, w):
        return lax.conv_general_dilated(inp, w, (1, 1), ((1, 1), (1, 1)),
                                        dimension_numbers=dn)

    def bn(inp, g, b, m, v):
        return (inp - m) / jnp.sqrt(v + EPS) * g + b

    for p in block_params:
        out = conv(x, p["w1"])
        out = jnp.maximum(bn(out, p["bn1_gamma"], p["bn1_beta"],
                             p["bn1_mean"], p["bn1_var"]), 0.0)
        out = conv(out, p["w2"])
        out = bn(out, p["bn2_gamma"], p["bn2_beta"], p["bn2_mean"], p["bn2_var"])
        x = jnp.maximum(out + x, 0.0)
    return jnp.transpose(x, (0, 3, 1, 2))


# ------------------------------ main ------------------------------

def _make_block_params(key, chan):
    ks = jax.random.split(key, 8)
    return {
        # conv weights in HWIO layout (3, 3, Cin, Cout), bias=False like resnet conv3x3
        "w1": jax.random.normal(ks[0], (3, 3, chan, chan), jnp.float32) * 0.1,
        "w2": jax.random.normal(ks[1], (3, 3, chan, chan), jnp.float32) * 0.1,
        # BatchNorm parameters / running stats (eval-mode fold)
        "bn1_gamma": 1.0 + 0.1 * jax.random.normal(ks[2], (chan,), jnp.float32),
        "bn1_beta": 0.1 * jax.random.normal(ks[3], (chan,), jnp.float32),
        "bn1_mean": 0.1 * jax.random.normal(ks[4], (chan,), jnp.float32),
        "bn1_var": jnp.abs(jax.random.normal(ks[5], (chan,), jnp.float32)) + 0.5,
        "bn2_gamma": 1.0 + 0.1 * jax.random.normal(ks[6], (chan,), jnp.float32),
        "bn2_beta": 0.1 * jax.random.normal(ks[7], (chan,), jnp.float32),
        "bn2_mean": jnp.zeros((chan,), jnp.float32),
        "bn2_var": jnp.ones((chan,), jnp.float32),
    }


if __name__ == "__main__":
    B, C, H, W = 2, 4, 16, 16   # small stride-1 stage: inplanes == planes == 4
    key = jax.random.PRNGKey(0)
    kx, k1, k2 = jax.random.split(key, 3)
    x = jax.random.normal(kx, (B, C, H, W), jnp.float32)
    blocks = [_make_block_params(k1, C), _make_block_params(k2, C)]   # layers=[2, ...]
    n_blocks = len(blocks)

    ref = jax.block_until_ready(_ref_stage_forward(x, blocks))

    lane_pack = pick_lane_pack(B, W * C)   # = 2 -> 128-lane activations, K = N = 128

    # Strict numerics check: f32 MXU operands (also the recommended v5e epilogue path).
    prep_f32 = prepare_stage_params(blocks, width=W, lane_pack=lane_pack,
                                    compute_dtype=jnp.float32)
    fwd_f32 = jax.jit(functools.partial(audio_visual_resnet_stage_forward,
                                        n_blocks=n_blocks, lane_pack=lane_pack,
                                        compute_dtype=jnp.float32))
    out_f32 = jax.block_until_ready(fwd_f32(x, prep_f32))
    assert out_f32.shape == (B, C, H, W), out_f32.shape
    err_f32 = float(jnp.max(jnp.abs(out_f32 - ref)))
    assert err_f32 < 5e-4, err_f32

    # Fast path: bf16 MXU operands / bf16 activations in HBM; f32 accumulation, f32 BN/ReLU
    # epilogue; the inter-block residual stays f32 inside the kernel (only the HBM input
    # identity is bf16-quantized -- intentional). Looser tolerance reflects bf16 operand
    # quantization over two chained residual blocks.
    prep_bf16 = prepare_stage_params(blocks, width=W, lane_pack=lane_pack,
                                     compute_dtype=jnp.bfloat16)
    fwd_bf16 = jax.jit(functools.partial(audio_visual_resnet_stage_forward,
                                         n_blocks=n_blocks, lane_pack=lane_pack,
                                         compute_dtype=jnp.bfloat16))
    out_bf16 = jax.block_until_ready(fwd_bf16(x, prep_bf16))
    err_bf16 = float(jnp.max(jnp.abs(out_bf16 - ref)))
    assert err_bf16 < 1.5e-1, err_bf16

    print("KERNEL_OK")
</pallas_src>

<mosaic_0001>
module attributes {stable_mosaic.version = 11 : i64} {
  func.func @kernel(%arg0: i32, %arg1: memref<1x24x128xf32, #tpu.memory_space<vmem>>, %arg2: memref<3x128x128xf32, #tpu.memory_space<vmem>>, %arg3: memref<1x128xf32, #tpu.memory_space<vmem>>, %arg4: memref<1x128xf32, #tpu.memory_space<vmem>>, %arg5: memref<3x128x128xf32, #tpu.memory_space<vmem>>, %arg6: memref<1x128xf32, #tpu.memory_space<vmem>>, %arg7: memref<1x128xf32, #tpu.memory_space<vmem>>, %arg8: memref<3x128x128xf32, #tpu.memory_space<vmem>>, %arg9: memref<1x128xf32, #tpu.memory_space<vmem>>, %arg10: memref<1x128xf32, #tpu.memory_space<vmem>>, %arg11: memref<3x128x128xf32, #tpu.memory_space<vmem>>, %arg12: memref<1x128xf32, #tpu.memory_space<vmem>>, %arg13: memref<1x128xf32, #tpu.memory_space<vmem>>, %arg14: memref<1x16x128xf32, #tpu.memory_space<vmem>>) attributes {dimension_semantics = [#tpu.dimension_semantics<parallel>], iteration_bounds = array<i64: 1>, scalar_prefetch = 0 : i64, scratch_operands = 0 : i64, tpu.core_type = #tpu.core_type<tc>, window_params = [{transform_indices = @transform_0, window_bounds = array<i64: 1, 24, 128>}, {pipeline_mode = #tpu.pipeline_mode<synchronous>, transform_indices = @transform_1, window_bounds = array<i64: 3, 128, 128>}, {pipeline_mode = #tpu.pipeline_mode<synchronous>, transform_indices = @transform_2, window_bounds = array<i64: 1, 128>}, {pipeline_mode = #tpu.pipeline_mode<synchronous>, transform_indices = @transform_3, window_bounds = array<i64: 1, 128>}, {pipeline_mode = #tpu.pipeline_mode<synchronous>, transform_indices = @transform_4, window_bounds = array<i64: 3, 128, 128>}, {pipeline_mode = #tpu.pipeline_mode<synchronous>, transform_indices = @transform_5, window_bounds = array<i64: 1, 128>}, {pipeline_mode = #tpu.pipeline_mode<synchronous>, transform_indices = @transform_6, window_bounds = array<i64: 1, 128>}, {pipeline_mode = #tpu.pipeline_mode<synchronous>, transform_indices = @transform_7, window_bounds = array<i64: 3, 128, 128>}, {pipeline_mode = #tpu.pipeline_mode<synchronous>, transform_indices = @transform_8, window_bounds = array<i64: 1, 128>}, {pipeline_mode = #tpu.pipeline_mode<synchronous>, transform_indices = @transform_9, window_bounds = array<i64: 1, 128>}, {pipeline_mode = #tpu.pipeline_mode<synchronous>, transform_indices = @transform_10, window_bounds = array<i64: 3, 128, 128>}, {pipeline_mode = #tpu.pipeline_mode<synchronous>, transform_indices = @transform_11, window_bounds = array<i64: 1, 128>}, {pipeline_mode = #tpu.pipeline_mode<synchronous>, transform_indices = @transform_12, window_bounds = array<i64: 1, 128>}, {transform_indices = @transform_13, window_bounds = array<i64: 1, 16, 128>}]} {
    %c0 = arith.constant 0 : index
    %c0_0 = arith.constant 0 : index
    %c0_1 = arith.constant 0 : index
    %0 = vector.load %arg1[%c0, %c0_0, %c0_1] : memref<1x24x128xf32, #tpu.memory_space<vmem>>, vector<1x24x128xf32>
    %1 = vector.shape_cast %0 : vector<1x24x128xf32> to vector<24x128xf32>
    %2 = vector.extract_strided_slice %1 {offsets = [0, 0], sizes = [22, 128], strides = [1, 1]} : vector<24x128xf32> to vector<22x128xf32>
    %c0_2 = arith.constant 0 : index
    %c0_3 = arith.constant 0 : index
    %c0_4 = arith.constant 0 : index
    %3 = vector.load %arg2[%c0_2, %c0_3, %c0_4] : memref<3x128x128xf32, #tpu.memory_space<vmem>>, vector<1x128x128xf32>
    %4 = vector.shape_cast %3 : vector<1x128x128xf32> to vector<128x128xf32>
    %cst = arith.constant dense<0.000000e+00> : vector<22x128xf32>
    %5 = tpu.matmul %2, %4, %cst {dimension_numbers = #tpu.dot_dimension_numbers<[1], [0], [0], [1], [0, 0, 1, 1], [], []>} : vector<22x128xf32>, vector<128x128xf32>, vector<22x128xf32> -> vector<22x128xf32>
    %6 = vector.extract_strided_slice %1 {offsets = [1, 0], sizes = [22, 128], strides = [1, 1]} : vector<24x128xf32> to vector<22x128xf32>
    %c1 = arith.constant 1 : index
    %c0_5 = arith.constant 0 : index
    %c0_6 = arith.constant 0 : index
    %7 = vector.load %arg2[%c1, %c0_5, %c0_6] : memref<3x128x128xf32, #tpu.memory_space<vmem>>, vector<1x128x128xf32>
    %8 = vector.shape_cast %7 : vector<1x128x128xf32> to vector<128x128xf32>
    %cst_7 = arith.constant dense<0.000000e+00> : vector<22x128xf32>
    %9 = tpu.matmul %6, %8, %cst_7 {dimension_numbers = #tpu.dot_dimension_numbers<[1], [0], [0], [1], [0, 0, 1, 1], [], []>} : vector<22x128xf32>, vector<128x128xf32>, vector<22x128xf32> -> vector<22x128xf32>
    %10 = arith.addf %5, %9 : vector<22x128xf32>
    %11 = vector.extract_strided_slice %1 {offsets = [2, 0], sizes = [22, 128], strides = [1, 1]} : vector<24x128xf32> to vector<22x128xf32>
    %c2 = arith.constant 2 : index
    %c0_8 = arith.constant 0 : index
    %c0_9 = arith.constant 0 : index
    %12 = vector.load %arg2[%c2, %c0_8, %c0_9] : memref<3x128x128xf32, #tpu.memory_space<vmem>>, vector<1x128x128xf32>
    %13 = vector.shape_cast %12 : vector<1x128x128xf32> to vector<128x128xf32>
    %cst_10 = arith.constant dense<0.000000e+00> : vector<22x128xf32>
    %14 = tpu.matmul %11, %13, %cst_10 {dimension_numbers = #tpu.dot_dimension_numbers<[1], [0], [0], [1], [0, 0, 1, 1], [], []>} : vector<22x128xf32>, vector<128x128xf32>, vector<22x128xf32> -> vector<22x128xf32>
    %15 = arith.addf %10, %14 : vector<22x128xf32>
    %c0_11 = arith.constant 0 : index
    %c0_12 = arith.constant 0 : index
    %16 = vector.load %arg3[%c0_11, %c0_12] : memref<1x128xf32, #tpu.memory_space<vmem>>, vector<1x128xf32>
    %17 = vector.broadcast %16 : vector<1x128xf32> to vector<22x128xf32>
    %18 = arith.mulf %15, %17 : vector<22x128xf32>
    %c0_13 = arith.constant 0 : index
    %c0_14 = arith.constant 0 : index
    %19 = vector.load %arg4[%c0_13, %c0_14] : memref<1x128xf32, #tpu.memory_space<vmem>>, vector<1x128xf32>
    %20 = vector.broadcast %19 : vector<1x128xf32> to vector<22x128xf32>
    %21 = arith.addf %18, %20 : vector<22x128xf32>
    %cst_15 = arith.constant 0.000000e+00 : f32
    %22 = vector.broadcast %cst_15 : f32 to vector<22x128xf32>
    %23 = arith.maximumf %21, %22 : vector<22x128xf32>
    %24 = tpu.iota {dimensions = array<i32: 0>} : vector<22x1xi32>
    %c3_i32 = arith.constant 3 : i32
    %25 = vector.broadcast %c3_i32 : i32 to vector<22x1xi32>
    %26 = arith.subi %24, %25 : vector<22x1xi32>
    %c0_i32 = arith.constant 0 : i32
    %27 = vector.broadcast %c0_i32 : i32 to vector<22x1xi32>
    %28 = arith.cmpi sge, %26, %27 : vector<22x1xi32>
    %c16_i32 = arith.constant 16 : i32
    %29 = vector.broadcast %c16_i32 : i32 to vector<22x1xi32>
    %30 = arith.cmpi slt, %26, %29 : vector<22x1xi32>
    %31 = arith.andi %28, %30 : vector<22x1xi1>
    %cst_16 = arith.constant 0.000000e+00 : f32
    %32 = vector.shape_cast %31 : vector<22x1xi1> to vector<22x1xi1>
    %33 = vector.broadcast %32 : vector<22x1xi1> to vector<22x128xi1>
    %34 = vector.broadcast %cst_16 : f32 to vector<22x128xf32>
    %35 = arith.select %33, %23, %34 : vector<22x128xi1>, vector<22x128xf32>
    %36 = vector.extract_strided_slice %35 {offsets = [0, 0], sizes = [20, 128], strides = [1, 1]} : vector<22x128xf32> to vector<20x128xf32>
    %c0_17 = arith.constant 0 : index
    %c0_18 = arith.constant 0 : index
    %c0_19 = arith.constant 0 : index
    %37 = vector.load %arg5[%c0_17, %c0_18, %c0_19] : memref<3x128x128xf32, #tpu.memory_space<vmem>>, vector<1x128x128xf32>
    %38 = vector.shape_cast %37 : vector<1x128x128xf32> to vector<128x128xf32>
    %cst_20 = arith.constant dense<0.000000e+00> : vector<20x128xf32>
    %39 = tpu.matmul %36, %38, %cst_20 {dimension_numbers = #tpu.dot_dimension_numbers<[1], [0], [0], [1], [0, 0, 1, 1], [], []>} : vector<20x128xf32>, vector<128x128xf32>, vector<20x128xf32> -> vector<20x128xf32>
    %40 = vector.extract_strided_slice %35 {offsets = [1, 0], sizes = [20, 128], strides = [1, 1]} : vector<22x128xf32> to vector<20x128xf32>
    %c1_21 = arith.constant 1 : index
    %c0_22 = arith.constant 0 : index
    %c0_23 = arith.constant 0 : index
    %41 = vector.load %arg5[%c1_21, %c0_22, %c0_23] : memref<3x128x128xf32, #tpu.memory_space<vmem>>, vector<1x128x128xf32>
    %42 = vector.shape_cast %41 : vector<1x128x128xf32> to vector<128x128xf32>
    %cst_24 = arith.constant dense<0.000000e+00> : vector<20x128xf32>
    %43 = tpu.matmul %40, %42, %cst_24 {dimension_numbers = #tpu.dot_dimension_numbers<[1], [0], [0], [1], [0, 0, 1, 1], [], []>} : vector<20x128xf32>, vector<128x128xf32>, vector<20x128xf32> -> vector<20x128xf32>
    %44 = arith.addf %39, %43 : vector<20x128xf32>
    %45 = vector.extract_strided_slice %35 {offsets = [2, 0], sizes = [20, 128], strides = [1, 1]} : vector<22x128xf32> to vector<20x128xf32>
    %c2_25 = arith.constant 2 : index
    %c0_26 = arith.constant 0 : index
    %c0_27 = arith.constant 0 : index
    %46 = vector.load %arg5[%c2_25, %c0_26, %c0_27] : memref<3x128x128xf32, #tpu.memory_space<vmem>>, vector<1x128x128xf32>
    %47 = vector.shape_cast %46 : vector<1x128x128xf32> to vector<128x128xf32>
    %cst_28 = arith.constant dense<0.000000e+00> : vector<20x128xf32>
    %48 = tpu.matmul %45, %47, %cst_28 {dimension_numbers = #tpu.dot_dimension_numbers<[1], [0], [0], [1], [0, 0, 1, 1], [], []>} : vector<20x128xf32>, vector<128x128xf32>, vector<20x128xf32> -> vector<20x128xf32>
    %49 = arith.addf %44, %48 : vector<20x128xf32>
    %c0_29 = arith.constant 0 : index
    %c0_30 = arith.constant 0 : index
    %50 = vector.load %arg6[%c0_29, %c0_30] : memref<1x128xf32, #tpu.memory_space<vmem>>, vector<1x128xf32>
    %51 = vector.broadcast %50 : vector<1x128xf32> to vector<20x128xf32>
    %52 = arith.mulf %49, %51 : vector<20x128xf32>
    %c0_31 = arith.constant 0 : index
    %c0_32 = arith.constant 0 : index
    %53 = vector.load %arg7[%c0_31, %c0_32] : memref<1x128xf32, #tpu.memory_space<vmem>>, vector<1x128xf32>
    %54 = vector.broadcast %53 : vector<1x128xf32> to vector<20x128xf32>
    %55 = arith.addf %52, %54 : vector<20x128xf32>
    %56 = vector.extract_strided_slice %1 {offsets = [2, 0], sizes = [20, 128], strides = [1, 1]} : vector<24x128xf32> to vector<20x128xf32>
    %57 = arith.addf %55, %56 : vector<20x128xf32>
    %cst_33 = arith.constant 0.000000e+00 : f32
    %58 = vector.broadcast %cst_33 : f32 to vector<20x128xf32>
    %59 = arith.maximumf %57, %58 : vector<20x128xf32>
    %60 = tpu.iota {dimensions = array<i32: 0>} : vector<20x1xi32>
    %c2_i32 = arith.constant 2 : i32
    %61 = vector.broadcast %c2_i32 : i32 to vector<20x1xi32>
    %62 = arith.subi %60, %61 : vector<20x1xi32>
    %c0_i32_34 = arith.constant 0 : i32
    %63 = vector.broadcast %c0_i32_34 : i32 to vector<20x1xi32>
    %64 = arith.cmpi sge, %62, %63 : vector<20x1xi32>
    %c16_i32_35 = arith.constant 16 : i32
    %65 = vector.broadcast %c16_i32_35 : i32 to vector<20x1xi32>
    %66 = arith.cmpi slt, %62, %65 : vector<20x1xi32>
    %67 = arith.andi %64, %66 : vector<20x1xi1>
    %cst_36 = arith.constant 0.000000e+00 : f32
    %68 = vector.shape_cast %67 : vector<20x1xi1> to vector<20x1xi1>
    %69 = vector.broadcast %68 : vector<20x1xi1> to vector<20x128xi1>
    %70 = vector.broadcast %cst_36 : f32 to vector<20x128xf32>
    %71 = arith.select %69, %59, %70 : vector<20x128xi1>, vector<20x128xf32>
    %72 = vector.extract_strided_slice %71 {offsets = [0, 0], sizes = [18, 128], strides = [1, 1]} : vector<20x128xf32> to vector<18x128xf32>
    %c0_37 = arith.constant 0 : index
    %c0_38 = arith.constant 0 : index
    %c0_39 = arith.constant 0 : index
    %73 = vector.load %arg8[%c0_37, %c0_38, %c0_39] : memref<3x128x128xf32, #tpu.memory_space<vmem>>, vector<1x128x128xf32>
    %74 = vector.shape_cast %73 : vector<1x128x128xf32> to vector<128x128xf32>
    %cst_40 = arith.constant dense<0.000000e+00> : vector<18x128xf32>
    %75 = tpu.matmul %72, %74, %cst_40 {dimension_numbers = #tpu.dot_dimension_numbers<[1], [0], [0], [1], [0, 0, 1, 1], [], []>} : vector<18x128xf32>, vector<128x128xf32>, vector<18x128xf32> -> vector<18x128xf32>
    %76 = vector.extract_strided_slice %71 {offsets = [1, 0], sizes = [18, 128], strides = [1, 1]} : vector<20x128xf32> to vector<18x128xf32>
    %c1_41 = arith.constant 1 : index
    %c0_42 = arith.constant 0 : index
    %c0_43 = arith.constant 0 : index
    %77 = vector.load %arg8[%c1_41, %c0_42, %c0_43] : memref<3x128x128xf32, #tpu.memory_space<vmem>>, vector<1x128x128xf32>
    %78 = vector.shape_cast %77 : vector<1x128x128xf32> to vector<128x128xf32>
    %cst_44 = arith.constant dense<0.000000e+00> : vector<18x128xf32>
    %79 = tpu.matmul %76, %78, %cst_44 {dimension_numbers = #tpu.dot_dimension_numbers<[1], [0], [0], [1], [0, 0, 1, 1], [], []>} : vector<18x128xf32>, vector<128x128xf32>, vector<18x128xf32> -> vector<18x128xf32>
    %80 = arith.addf %75, %79 : vector<18x128xf32>
    %81 = vector.extract_strided_slice %71 {offsets = [2, 0], sizes = [18, 128], strides = [1, 1]} : vector<20x128xf32> to vector<18x128xf32>
    %c2_45 = arith.constant 2 : index
    %c0_46 = arith.constant 0 : index
    %c0_47 = arith.constant 0 : index
    %82 = vector.load %arg8[%c2_45, %c0_46, %c0_47] : memref<3x128x128xf32, #tpu.memory_space<vmem>>, vector<1x128x128xf32>
    %83 = vector.shape_cast %82 : vector<1x128x128xf32> to vector<128x128xf32>
    %cst_48 = arith.constant dense<0.000000e+00> : vector<18x128xf32>
    %84 = tpu.matmul %81, %83, %cst_48 {dimension_numbers = #tpu.dot_dimension_numbers<[1], [0], [0], [1], [0, 0, 1, 1], [], []>} : vector<18x128xf32>, vector<128x128xf32>, vector<18x128xf32> -> vector<18x128xf32>
    %85 = arith.addf %80, %84 : vector<18x128xf32>
    %c0_49 = arith.constant 0 : index
    %c0_50 = arith.constant 0 : index
    %86 = vector.load %arg9[%c0_49, %c0_50] : memref<1x128xf32, #tpu.memory_space<vmem>>, vector<1x128xf32>
    %87 = vector.broadcast %86 : vector<1x128xf32> to vector<18x128xf32>
    %88 = arith.mulf %85, %87 : vector<18x128xf32>
    %c0_51 = arith.constant 0 : index
    %c0_52 = arith.constant 0 : index
    %89 = vector.load %arg10[%c0_51, %c0_52] : memref<1x128xf32, #tpu.memory_space<vmem>>, vector<1x128xf32>
    %90 = vector.broadcast %89 : vector<1x128xf32> to vector<18x128xf32>
    %91 = arith.addf %88, %90 : vector<18x128xf32>
    %cst_53 = arith.constant 0.000000e+00 : f32
    %92 = vector.broadcast %cst_53 : f32 to vector<18x128xf32>
    %93 = arith.maximumf %91, %92 : vector<18x128xf32>
    %94 = tpu.iota {dimensions = array<i32: 0>} : vector<18x1xi32>
    %c1_i32 = arith.constant 1 : i32
    %95 = vector.broadcast %c1_i32 : i32 to vector<18x1xi32>
    %96 = arith.subi %94, %95 : vector<18x1xi32>
    %c0_i32_54 = arith.constant 0 : i32
    %97 = vector.broadcast %c0_i32_54 : i32 to vector<18x1xi32>
    %98 = arith.cmpi sge, %96, %97 : vector<18x1xi32>
    %c16_i32_55 = arith.constant 16 : i32
    %99 = vector.broadcast %c16_i32_55 : i32 to vector<18x1xi32>
    %100 = arith.cmpi slt, %96, %99 : vector<18x1xi32>
    %101 = arith.andi %98, %100 : vector<18x1xi1>
    %cst_56 = arith.constant 0.000000e+00 : f32
    %102 = vector.shape_cast %101 : vector<18x1xi1> to vector<18x1xi1>
    %103 = vector.broadcast %102 : vector<18x1xi1> to vector<18x128xi1>
    %104 = vector.broadcast %cst_56 : f32 to vector<18x128xf32>
    %105 = arith.select %103, %93, %104 : vector<18x128xi1>, vector<18x128xf32>
    %106 = vector.extract_strided_slice %105 {offsets = [0, 0], sizes = [16, 128], strides = [1, 1]} : vector<18x128xf32> to vector<16x128xf32>
    %c0_57 = arith.constant 0 : index
    %c0_58 = arith.constant 0 : index
    %c0_59 = arith.constant 0 : index
    %107 = vector.load %arg11[%c0_57, %c0_58, %c0_59] : memref<3x128x128xf32, #tpu.memory_space<vmem>>, vector<1x128x128xf32>
    %108 = vector.shape_cast %107 : vector<1x128x128xf32> to vector<128x128xf32>
    %cst_60 = arith.constant dense<0.000000e+00> : vector<16x128xf32>
    %109 = tpu.matmul %106, %108, %cst_60 {dimension_numbers = #tpu.dot_dimension_numbers<[1], [0], [0], [1], [0, 0, 1, 1], [], []>} : vector<16x128xf32>, vector<128x128xf32>, vector<16x128xf32> -> vector<16x128xf32>
    %110 = vector.extract_strided_slice %105 {offsets = [1, 0], sizes = [16, 128], strides = [1, 1]} : vector<18x128xf32> to vector<16x128xf32>
    %c1_61 = arith.constant 1 : index
    %c0_62 = arith.constant 0 : index
    %c0_63 = arith.constant 0 : index
    %111 = vector.load %arg11[%c1_61, %c0_62, %c0_63] : memref<3x128x128xf32, #tpu.memory_space<vmem>>, vector<1x128x128xf32>
    %112 = vector.shape_cast %111 : vector<1x128x128xf32> to vector<128x128xf32>
    %cst_64 = arith.constant dense<0.000000e+00> : vector<16x128xf32>
    %113 = tpu.matmul %110, %112, %cst_64 {dimension_numbers = #tpu.dot_dimension_numbers<[1], [0], [0], [1], [0, 0, 1, 1], [], []>} : vector<16x128xf32>, vector<128x128xf32>, vector<16x128xf32> -> vector<16x128xf32>
    %114 = arith.addf %109, %113 : vector<16x128xf32>
    %115 = vector.extract_strided_slice %105 {offsets = [2, 0], sizes = [16, 128], strides = [1, 1]} : vector<18x128xf32> to vector<16x128xf32>
    %c2_65 = arith.constant 2 : index
    %c0_66 = arith.constant 0 : index
    %c0_67 = arith.constant 0 : index
    %116 = vector.load %arg11[%c2_65, %c0_66, %c0_67] : memref<3x128x128xf32, #tpu.memory_space<vmem>>, vector<1x128x128xf32>
    %117 = vector.shape_cast %116 : vector<1x128x128xf32> to vector<128x128xf32>
    %cst_68 = arith.constant dense<0.000000e+00> : vector<16x128xf32>
    %118 = tpu.matmul %115, %117, %cst_68 {dimension_numbers = #tpu.dot_dimension_numbers<[1], [0], [0], [1], [0, 0, 1, 1], [], []>} : vector<16x128xf32>, vector<128x128xf32>, vector<16x128xf32> -> vector<16x128xf32>
    %119 = arith.addf %114, %118 : vector<16x128xf32>
    %c0_69 = arith.constant 0 : index
    %c0_70 = arith.constant 0 : index
    %120 = vector.load %arg12[%c0_69, %c0_70] : memref<1x128xf32, #tpu.memory_space<vmem>>, vector<1x128xf32>
    %121 = vector.broadcast %120 : vector<1x128xf32> to vector<16x128xf32>
    %122 = arith.mulf %119, %121 : vector<16x128xf32>
    %c0_71 = arith.constant 0 : index
    %c0_72 = arith.constant 0 : index
    %123 = vector.load %arg13[%c0_71, %c0_72] : memref<1x128xf32, #tpu.memory_space<vmem>>, vector<1x128xf32>
    %124 = vector.broadcast %123 : vector<1x128xf32> to vector<16x128xf32>
    %125 = arith.addf %122, %124 : vector<16x128xf32>
    %126 = vector.extract_strided_slice %71 {offsets = [2, 0], sizes = [16, 128], strides = [1, 1]} : vector<20x128xf32> to vector<16x128xf32>
    %127 = arith.addf %125, %126 : vector<16x128xf32>
    %cst_73 = arith.constant 0.000000e+00 : f32
    %128 = vector.broadcast %cst_73 : f32 to vector<16x128xf32>
    %129 = arith.maximumf %127, %128 : vector<16x128xf32>
    %c0_74 = arith.constant 0 : index
    %c0_75 = arith.constant 0 : index
    %c0_76 = arith.constant 0 : index
    %130 = vector.load %arg14[%c0_74, %c0_75, %c0_76] : memref<1x16x128xf32, #tpu.memory_space<vmem>>, vector<1x16x128xf32>
    %131 = vector.shape_cast %130 : vector<1x16x128xf32> to vector<16x128xf32>
    %132 = vector.shape_cast %129 : vector<16x128xf32> to vector<1x16x128xf32>
    tpu.vector_store %arg14[%c0_74, %c0_75, %c0_76], %132 {strides = array<i32>} : memref<1x16x128xf32, #tpu.memory_space<vmem>>, vector<1x16x128xf32>,
    return
  }
  func.func @transform_0(%arg0: i32) -> (i32, i32, i32) {
    %c0_i32 = arith.constant 0 : i32
    %c0_i32_0 = arith.constant 0 : i32
    %c0_i32_1 = arith.constant 0 : i32
    return %arg0, %c0_i32, %c0_i32_0 : i32, i32, i32
  }
  func.func @transform_1(%arg0: i32) -> (i32, i32, i32) {
    %c0_i32 = arith.constant 0 : i32
    %c0_i32_0 = arith.constant 0 : i32
    %c0_i32_1 = arith.constant 0 : i32
    %c0_i32_2 = arith.constant 0 : i32
    return %c0_i32, %c0_i32_0, %c0_i32_1 : i32, i32, i32
  }
  func.func @transform_2(%arg0: i32) -> (i32, i32) {
    %c0_i32 = arith.constant 0 : i32
    %c0_i32_0 = arith.constant 0 : i32
    %c0_i32_1 = arith.constant 0 : i32
    return %c0_i32, %c0_i32_0 : i32, i32
  }
  func.func @transform_3(%arg0: i32) -> (i32, i32) {
    %c0_i32 = arith.constant 0 : i32
    %c0_i32_0 = arith.constant 0 : i32
    %c0_i32_1 = arith.constant 0 : i32
    return %c0_i32, %c0_i32_0 : i32, i32
  }
  func.func @transform_4(%arg0: i32) -> (i32, i32, i32) {
    %c0_i32 = arith.constant 0 : i32
    %c0_i32_0 = arith.constant 0 : i32
    %c0_i32_1 = arith.constant 0 : i32
    %c0_i32_2 = arith.constant 0 : i32
    return %c0_i32, %c0_i32_0, %c0_i32_1 : i32, i32, i32
  }
  func.func @transform_5(%arg0: i32) -> (i32, i32) {
    %c0_i32 = arith.constant 0 : i32
    %c0_i32_0 = arith.constant 0 : i32
    %c0_i32_1 = arith.constant 0 : i32
    return %c0_i32, %c0_i32_0 : i32, i32
  }
  func.func @transform_6(%arg0: i32) -> (i32, i32) {
    %c0_i32 = arith.constant 0 : i32
    %c0_i32_0 = arith.constant 0 : i32
    %c0_i32_1 = arith.constant 0 : i32
    return %c0_i32, %c0_i32_0 : i32, i32
  }
  func.func @transform_7(%arg0: i32) -> (i32, i32, i32) {
    %c0_i32 = arith.constant 0 : i32
    %c0_i32_0 = arith.constant 0 : i32
    %c0_i32_1 = arith.constant 0 : i32
    %c0_i32_2 = arith.constant 0 : i32
    return %c0_i32, %c0_i32_0, %c0_i32_1 : i32, i32, i32
  }
  func.func @transform_8(%arg0: i32) -> (i32, i32) {
    %c0_i32 = arith.constant 0 : i32
    %c0_i32_0 = arith.constant 0 : i32
    %c0_i32_1 = arith.constant 0 : i32
    return %c0_i32, %c0_i32_0 : i32, i32
  }
  func.func @transform_9(%arg0: i32) -> (i32, i32) {
    %c0_i32 = arith.constant 0 : i32
    %c0_i32_0 = arith.constant 0 : i32
    %c0_i32_1 = arith.constant 0 : i32
    return %c0_i32, %c0_i32_0 : i32, i32
  }
  func.func @transform_10(%arg0: i32) -> (i32, i32, i32) {
    %c0_i32 = arith.constant 0 : i32
    %c0_i32_0 = arith.constant 0 : i32
    %c0_i32_1 = arith.constant 0 : i32
    %c0_i32_2 = arith.constant 0 : i32
    return %c0_i32, %c0_i32_0, %c0_i32_1 : i32, i32, i32
  }
  func.func @transform_11(%arg0: i32) -> (i32, i32) {
    %c0_i32 = arith.constant 0 : i32
    %c0_i32_0 = arith.constant 0 : i32
    %c0_i32_1 = arith.constant 0 : i32
    return %c0_i32, %c0_i32_0 : i32, i32
  }
  func.func @transform_12(%arg0: i32) -> (i32, i32) {
    %c0_i32 = arith.constant 0 : i32
    %c0_i32_0 = arith.constant 0 : i32
    %c0_i32_1 = arith.constant 0 : i32
    return %c0_i32, %c0_i32_0 : i32, i32
  }
  func.func @transform_13(%arg0: i32) -> (i32, i32, i32) {
    %c0_i32 = arith.constant 0 : i32
    %c0_i32_0 = arith.constant 0 : i32
    %c0_i32_1 = arith.constant 0 : i32
    return %arg0, %c0_i32, %c0_i32_0 : i32, i32, i32
  }
}

</mosaic_0001>

<llo_original>
// kernel: audio_visual_resnet_stage_forward.1
$region0: #{audio_visual_resnet_stage_forward.1}
  #allocation0 [shape = 'u32[]', space=smem, size = 0x4, offset = 0x4, fixed_abs, tag = 'smem constant byte address 0x4 - core index']
  #allocation1 [shape = 'u32[144,128]{1,0:T(1,128)}', space=vmem, size = 0x12000, scoped, tag = 'internal scratch']
  %s0 = inlined_call_operand.vmem [shape: f32[1,24,128], index: 0, kind: input, shape index: {}]
  %s1 = inlined_call_operand.vmem [shape: f32[3,128,128], index: 1, kind: input, shape index: {}]
  %s2 = inlined_call_operand.vmem [shape: f32[1,128], index: 2, kind: input, shape index: {}]
  %s3 = inlined_call_operand.vmem [shape: f32[1,128], index: 3, kind: input, shape index: {}]
  %s4 = inlined_call_operand.hbm [shape: f32[3,128,128], index: 4, kind: input, shape index: {}]
  %s5 = inlined_call_operand.vmem [shape: f32[1,128], index: 5, kind: input, shape index: {}]
  %s6 = inlined_call_operand.vmem [shape: f32[1,128], index: 6, kind: input, shape index: {}]
  %s7 = inlined_call_operand.hbm [shape: f32[3,128,128], index: 7, kind: input, shape index: {}]
  %s8 = inlined_call_operand.vmem [shape: f32[1,128], index: 8, kind: input, shape index: {}]
  %s9 = inlined_call_operand.vmem [shape: f32[1,128], index: 9, kind: input, shape index: {}]
  %s10 = inlined_call_operand.hbm [shape: f32[3,128,128], index: 10, kind: input, shape index: {}]
  %s11 = inlined_call_operand.vmem [shape: f32[1,128], index: 11, kind: input, shape index: {}]
  %s12 = inlined_call_operand.vmem [shape: f32[1,128], index: 12, kind: input, shape index: {}]
  %s13 = inlined_call_operand.vmem [shape: f32[1,16,128], index: 13, kind: output, shape index: {}]
  %s14 = sld [smem:[#allocation0]]
  $region74: #{audio_visual_resnet_stage_forward.1} parent=0
    _
  %s16 = ssub.s32 1, %s14
  %s17 = scalar_select 0, %s16, %s14
  $region1: #{audio_visual_resnet_stage_forward.1} parent=0
    #allocation2 [shape = 'u8[196608]{0}', space=vmem, size = 0x30000, scoped, tag = 'input window, operand 4, single buffered']
    #allocation3 [shape = 's32[1]{0}', space=sflag, size = 0x4, scoped, tag = 'scoped memory for audio_visual_resnet_stage_forward.1']
    #allocation4 [shape = 'u8[196608]{0}', space=vmem, size = 0x30000, scoped, tag = 'input window, operand 7, single buffered']
    #allocation5 [shape = 's32[1]{0}', space=sflag, size = 0x4, scoped, tag = 'scoped memory for audio_visual_resnet_stage_forward.1']
    #allocation6 [shape = 'u8[196608]{0}', space=vmem, size = 0x30000, scoped, tag = 'input window, operand 10, single buffered']
    %18 = vsyncpa [#allocation3], 0
    %19 = vsyncpa [#allocation5], 0
    // Predicated region
    $region2: #{audio_visual_resnet_stage_forward.1} parent=1 // pred_check
      _
    $region3: #{audio_visual_resnet_stage_forward.1} parent=1 // pred_check_branch
      %21 = sbr.rel (0) target = $region5
    $region4: #{audio_visual_resnet_stage_forward.1} parent=1 // pred_region
      _
    $region5: #{audio_visual_resnet_stage_forward.1} parent=1 // pred_fallthru
      _
    // Predicated region
    $region6: #{audio_visual_resnet_stage_forward.1} parent=1 // pred_check
      _
    $region7: #{audio_visual_resnet_stage_forward.1} parent=1 // pred_check_branch
      %23 = sbr.rel (0) target = $region9
    $region8: #{audio_visual_resnet_stage_forward.1} parent=1 // pred_region
      _
    $region9: #{audio_visual_resnet_stage_forward.1} parent=1 // pred_fallthru
      _
    // Predicated region
    $region10: #{audio_visual_resnet_stage_forward.1} parent=1 // pred_check
      _
    $region11: #{audio_visual_resnet_stage_forward.1} parent=1 // pred_check_branch
      %25 = sbr.rel (0) target = $region13
    $region12: #{audio_visual_resnet_stage_forward.1} parent=1 // pred_region
      _
    $region13: #{audio_visual_resnet_stage_forward.1} parent=1 // pred_fallthru
      _
    // Predicated region
    $region14: #{audio_visual_resnet_stage_forward.1} parent=1 // pred_check
      _
    $region15: #{audio_visual_resnet_stage_forward.1} parent=1 // pred_check_branch
      %27 = sbr.rel (0) target = $region17
    $region16: #{audio_visual_resnet_stage_forward.1} parent=1 // pred_region
      _
    $region17: #{audio_visual_resnet_stage_forward.1} parent=1 // pred_fallthru
      _
    // Predicated region
    $region18: #{audio_visual_resnet_stage_forward.1} parent=1 // pred_check
      _
    $region19: #{audio_visual_resnet_stage_forward.1} parent=1 // pred_check_branch
      %29 = sbr.rel (0) target = $region21
    $region20: #{audio_visual_resnet_stage_forward.1} parent=1 // pred_region
      %s31 = ssub.s32 6144, 6144
      %32 = vsyncadd [#allocation3], %s31
      %s33 = sshll.u32 [#allocation2], 4
      %s34 = int_to_ptr.vmem [resolvable:$true] %s33
      %39 = dma.hbm_to_vmem [thread:$0]  %s4, 6144, %s34, [#allocation3], 128, 128, 8
    $region21: #{audio_visual_resnet_stage_forward.1} parent=1 // pred_fallthru
      _
    // Predicated region
    $region22: #{audio_visual_resnet_stage_forward.1} parent=1 // pred_check
      _
    $region23: #{audio_visual_resnet_stage_forward.1} parent=1 // pred_check_branch
      %41 = sbr.rel (0) target = $region25
    $region24: #{audio_visual_resnet_stage_forward.1} parent=1 // pred_region
      _
    $region25: #{audio_visual_resnet_stage_forward.1} parent=1 // pred_fallthru
      _
    // Predicated region
    $region26: #{audio_visual_resnet_stage_forward.1} parent=1 // pred_check
      _
    $region27: #{audio_visual_resnet_stage_forward.1} parent=1 // pred_check_branch
      %43 = sbr.rel (0) target = $region29
    $region28: #{audio_visual_resnet_stage_forward.1} parent=1 // pred_region
      _
    $region29: #{audio_visual_resnet_stage_forward.1} parent=1 // pred_fallthru
      _
    // Predicated region
    $region30: #{audio_visual_resnet_stage_forward.1} parent=1 // pred_check
      _
    $region31: #{audio_visual_resnet_stage_forward.1} parent=1 // pred_check_branch
      %45 = sbr.rel (0) target = $region33
    $region32: #{audio_visual_resnet_stage_forward.1} parent=1 // pred_region
      %s47 = ssub.s32 6144, 6144
      %48 = vsyncadd [#allocation5], %s47
      %s49 = sshll.u32 [#allocation4], 4
      %s50 = int_to_ptr.vmem [resolvable:$true] %s49
      %55 = dma.hbm_to_vmem [thread:$0]  %s7, 6144, %s50, [#allocation5], 128, 128, 8
    $region33: #{audio_visual_resnet_stage_forward.1} parent=1 // pred_fallthru
      _
    // Predicated region
    $region34: #{audio_visual_resnet_stage_forward.1} parent=1 // pred_check
      _
    $region35: #{audio_visual_resnet_stage_forward.1} parent=1 // pred_check_branch
      %57 = sbr.rel (0) target = $region37
    $region36: #{audio_visual_resnet_stage_forward.1} parent=1 // pred_region
      _
    $region37: #{audio_visual_resnet_stage_forward.1} parent=1 // pred_fallthru
      _
    // Predicated region
    $region38: #{audio_visual_resnet_stage_forward.1} parent=1 // pred_check
      _
    $region39: #{audio_visual_resnet_stage_forward.1} parent=1 // pred_check_branch
      %59 = sbr.rel (0) target = $region41
    $region40: #{audio_visual_resnet_stage_forward.1} parent=1 // pred_region
      _
    $region41: #{audio_visual_resnet_stage_forward.1} parent=1 // pred_fallthru
      _
    // Predicated region
    $region42: #{audio_visual_resnet_stage_forward.1} parent=1 // pred_check
      _
    $region43: #{audio_visual_resnet_stage_forward.1} parent=1 // pred_check_branch
      %61 = sbr.rel (0) target = $region45
    $region44: #{audio_visual_resnet_stage_forward.1} parent=1 // pred_region
      %s63 = ssub.s32 6144, 6144
      %64 = vsyncadd [#allocation5], %s63
      %s65 = sshll.u32 [#allocation6], 4
      %s66 = int_to_ptr.vmem [resolvable:$true] %s65
      %71 = dma.hbm_to_vmem [thread:$0]  %s10, 6144, %s66, [#allocation5], 128, 128, 8
    $region45: #{audio_visual_resnet_stage_forward.1} parent=1 // pred_fallthru
      _
    // Predicated region
    $region46: #{audio_visual_resnet_stage_forward.1} parent=1 // pred_check
      _
    $region47: #{audio_visual_resnet_stage_forward.1} parent=1 // pred_check_branch
      %73 = sbr.rel (0) target = $region49
    $region48: #{audio_visual_resnet_stage_forward.1} parent=1 // pred_region
      _
    $region49: #{audio_visual_resnet_stage_forward.1} parent=1 // pred_fallthru
      _
    // Predicated region
    $region50: #{audio_visual_resnet_stage_forward.1} parent=1 // pred_check
      _
    $region51: #{audio_visual_resnet_stage_forward.1} parent=1 // pred_check_branch
      %75 = sbr.rel (0) target = $region53
    $region52: #{audio_visual_resnet_stage_forward.1} parent=1 // pred_region
      _
    $region53: #{audio_visual_resnet_stage_forward.1} parent=1 // pred_fallthru
      _
    // Predicated region
    $region54: #{audio_visual_resnet_stage_forward.1} parent=1 // pred_check
      _
    $region55: #{audio_visual_resnet_stage_forward.1} parent=1 // pred_check_branch
      %77 = sbr.rel (0) target = $region57
    $region56: #{audio_visual_resnet_stage_forward.1} parent=1 // pred_region
      %78 = dma.done [#allocation3], 6144
    $region57: #{audio_visual_resnet_stage_forward.1} parent=1 // pred_fallthru
      _
    // Predicated region
    $region58: #{audio_visual_resnet_stage_forward.1} parent=1 // pred_check
      _
    $region59: #{audio_visual_resnet_stage_forward.1} parent=1 // pred_check_branch
      %80 = sbr.rel (0) target = $region61
    $region60: #{audio_visual_resnet_stage_forward.1} parent=1 // pred_region
      %81 = dma.done [#allocation5], 6144
    $region61: #{audio_visual_resnet_stage_forward.1} parent=1 // pred_fallthru
      _
    // Predicated region
    $region62: #{audio_visual_resnet_stage_forward.1} parent=1 // pred_check
      _
    $region63: #{audio_visual_resnet_stage_forward.1} parent=1 // pred_check_branch
      %83 = sbr.rel (0) target = $region65
    $region64: #{audio_visual_resnet_stage_forward.1} parent=1 // pred_region
      %84 = dma.done [#allocation5], 6144
    $region65: #{audio_visual_resnet_stage_forward.1} parent=1 // pred_fallthru
      _
    %v85 = vld [vmem:[%s0] sm:$0xff]
    %v86 = vld [vmem:[%s0 + $0x8] sm:$0xff]
    %v87 = vld [vmem:[%s0 + $0x10] sm:$0xff]
    %v88 = vld [vmem:[%s1] sm:$0xff]
    %v89 = vld [vmem:[%s1 + $0x8] sm:$0xff]
    %v90 = vld [vmem:[%s1 + $0x10] sm:$0xff]
    %v91 = vld [vmem:[%s1 + $0x18] sm:$0xff]
    %v92 = vld [vmem:[%s1 + $0x20] sm:$0xff]
    %v93 = vld [vmem:[%s1 + $0x28] sm:$0xff]
    %v94 = vld [vmem:[%s1 + $0x30] sm:$0xff]
    %v95 = vld [vmem:[%s1 + $0x38] sm:$0xff]
    %v96 = vld [vmem:[%s1 + $0x40] sm:$0xff]
    %v97 = vld [vmem:[%s1 + $0x48] sm:$0xff]
    %v98 = vld [vmem:[%s1 + $0x50] sm:$0xff]
    %v99 = vld [vmem:[%s1 + $0x58] sm:$0xff]
    %v100 = vld [vmem:[%s1 + $0x60] sm:$0xff]
    %v101 = vld [vmem:[%s1 + $0x68] sm:$0xff]
    %v102 = vld [vmem:[%s1 + $0x70] sm:$0xff]
    %v103 = vld [vmem:[%s1 + $0x78] sm:$0xff]
    %s104 = scalar_lea.vmem %s1, 128
    %v105 = vld [vmem:[%s104] sm:$0xff]
    %v106 = vld [vmem:[%s104 + $0x8] sm:$0xff]
    %v107 = vld [vmem:[%s104 + $0x10] sm:$0xff]
    %v108 = vld [vmem:[%s104 + $0x18] sm:$0xff]
    %v109 = vld [vmem:[%s104 + $0x20] sm:$0xff]
    %v110 = vld [vmem:[%s104 + $0x28] sm:$0xff]
    %v111 = vld [vmem:[%s104 + $0x30] sm:$0xff]
    %v112 = vld [vmem:[%s104 + $0x38] sm:$0xff]
    %v113 = vld [vmem:[%s104 + $0x40] sm:$0xff]
    %v114 = vld [vmem:[%s104 + $0x48] sm:$0xff]
    %v115 = vld [vmem:[%s104 + $0x50] sm:$0xff]
    %v116 = vld [vmem:[%s104 + $0x58] sm:$0xff]
    %v117 = vld [vmem:[%s104 + $0x60] sm:$0xff]
    %v118 = vld [vmem:[%s104 + $0x68] sm:$0xff]
    %v119 = vld [vmem:[%s104 + $0x70] sm:$0xff]
    %v120 = vld [vmem:[%s104 + $0x78] sm:$0xff]
    %vm124 = vcmask 1046528
    %v125 = vrot.slane %v85, 1
    %v126 = vrot.slane %v86, 1
    %v127 = vsel %vm124, %v125, %v126
    %v128 = vrot.slane %v87, 1
    %v129 = vsel %vm124, %v126, %v128
    %133 = vmatprep.subr.mxu0 0.0
    %134 = vmatpush1.msra.mxu0 %v105
    %135 = vmatprep.subr.mxu0 0.0
    %136 = vmatpush1.msra.mxu0 %v106
    %137 = vmatprep.subr.mxu0 0.0
    %138 = vmatpush1.msra.mxu0 %v107
    %139 = vmatprep.subr.mxu0 0.0
    %140 = vmatpush1.msra.mxu0 %v108
    %141 = vmatprep.subr.mxu0 0.0
    %142 = vmatpush1.msra.mxu0 %v109
    %143 = vmatprep.subr.mxu0 0.0
    %144 = vmatpush1.msra.mxu0 %v110
    %145 = vmatprep.subr.mxu0 0.0
    %146 = vmatpush1.msra.mxu0 %v111
    %147 = vmatprep.subr.mxu0 0.0
    %148 = vmatpush1.msra.mxu0 %v112
    %149 = vmatprep.subr.mxu0 0.0
    %150 = vmatpush1.msra.mxu0 %v113
    %151 = vmatprep.subr.mxu0 0.0
    %152 = vmatpush1.msra.mxu0 %v114
    %153 = vmatprep.subr.mxu0 0.0
    %154 = vmatpush1.msra.mxu0 %v115
    %155 = vmatprep.subr.mxu0 0.0
    %156 = vmatpush1.msra.mxu0 %v116
    %157 = vmatprep.subr.mxu0 0.0
    %158 = vmatpush1.msra.mxu0 %v117
    %159 = vmatprep.subr.mxu0 0.0
    %160 = vmatpush1.msra.mxu0 %v118
    %161 = vmatprep.subr.mxu0 0.0
    %162 = vmatpush1.msra.mxu0 %v119
    %163 = vmatprep.subr.mxu0 0.0
    %164 = vmatpush1.msra.mxu0 %v120
    %165 = vmatprep.subr.mxu0 0.0
    %166 = vmatpush1.msra.mxu0 0.0
    %167 = vmatprep.subr.mxu0 0.0
    %168 = vmatpush1.msra.mxu0 0.0
    %169 = vmatprep.subr.mxu0 0.0
    %170 = vmatpush1.msra.mxu0 0.0
    %171 = vmatprep.subr.mxu0 0.0
    %172 = vmatpush1.msra.mxu0 0.0
    %173 = vmatprep.subr.mxu0 0.0
    %174 = vmatpush1.msra.mxu0 0.0
    %175 = vmatprep.subr.mxu0 0.0
    %176 = vmatpush1.msra.mxu0 0.0
    %177 = vmatprep.subr.mxu0 0.0
    %178 = vmatpush1.msra.mxu0 0.0
    %179 = vmatprep.subr.mxu0 0.0
    %180 = vmatpush1.msra.mxu0 0.0
    %181 = vmatprep.subr.mxu0 0.0
    %182 = vmatpush1.msra.mxu0 0.0
    %183 = vmatprep.subr.mxu0 0.0
    %184 = vmatpush1.msra.mxu0 0.0
    %185 = vmatprep.subr.mxu0 0.0
    %186 = vmatpush1.msra.mxu0 0.0
    %187 = vmatprep.subr.mxu0 0.0
    %188 = vmatpush1.msra.mxu0 0.0
    %189 = vmatprep.subr.mxu0 0.0
    %190 = vmatpush1.msra.mxu0 0.0
    %191 = vmatprep.subr.mxu0 0.0
    %192 = vmatpush1.msra.mxu0 0.0
    %193 = vmatprep.subr.mxu0 0.0
    %194 = vmatpush1.msra.mxu0 0.0
    %195 = vmatprep.subr.mxu0 0.0
    %196 = vmatpush1.msra.mxu0 0.0
    %197 = vmatprep.mubr.f32.mxu0 0.0
    %198 = vmatmul.mubr.f32.gmra.mrb[0].mxu0 %v127
    %v199 = vpop.f32.mrb[0].mxu0
    %v200 = vadd.f32 0.0, %v199
    %v201 = vpop.f32.mrb[0].mxu0
    %202 = vmatprep.mubr.f32.mxu0 0.0
    %203 = vmatmul.mubr.f32.gmra.mrb[0].mxu0 %v129
    %v204 = vpop.f32.mrb[0].mxu0
    %v205 = vadd.f32 0.0, %v204
    %v206 = vpop.f32.mrb[0].mxu0
    %207 = vmatprep.mubr.f32.mxu0 0.0
    %208 = vmatmul.mubr.f32.gmra.mrb[0].mxu0 %v128
    %v209 = vpop.f32.mrb[0].mxu0
    %v210 = vadd.f32 0.0, %v209
    %v211 = vpop.f32.mrb[0].mxu0
    %212 = vdwg.mxu0
    %213 = vmatprep.subr.mxu0 0.0
    %214 = vmatpush1.msra.mxu0 %v88
    %215 = vmatprep.subr.mxu0 0.0
    %216 = vmatpush1.msra.mxu0 %v89
    %217 = vmatprep.subr.mxu0 0.0
    %218 = vmatpush1.msra.mxu0 %v90
    %219 = vmatprep.subr.mxu0 0.0
    %220 = vmatpush1.msra.mxu0 %v91
    %221 = vmatprep.subr.mxu0 0.0
    %222 = vmatpush1.msra.mxu0 %v92
    %223 = vmatprep.subr.mxu0 0.0
    %224 = vmatpush1.msra.mxu0 %v93
    %225 = vmatprep.subr.mxu0 0.0
    %226 = vmatpush1.msra.mxu0 %v94
    %227 = vmatprep.subr.mxu0 0.0
    %228 = vmatpush1.msra.mxu0 %v95
    %229 = vmatprep.subr.mxu0 0.0
    %230 = vmatpush1.msra.mxu0 %v96
    %231 = vmatprep.subr.mxu0 0.0
    %232 = vmatpush1.msra.mxu0 %v97
    %233 = vmatprep.subr.mxu0 0.0
    %234 = vmatpush1.msra.mxu0 %v98
    %235 = vmatprep.subr.mxu0 0.0
    %236 = vmatpush1.msra.mxu0 %v99
    %237 = vmatprep.subr.mxu0 0.0
    %238 = vmatpush1.msra.mxu0 %v100
    %239 = vmatprep.subr.mxu0 0.0
    %240 = vmatpush1.msra.mxu0 %v101
    %241 = vmatprep.subr.mxu0 0.0
    %242 = vmatpush1.msra.mxu0 %v102
    %243 = vmatprep.subr.mxu0 0.0
    %244 = vmatpush1.msra.mxu0 %v103
    %245 = vmatprep.subr.mxu0 0.0
    %246 = vmatpush1.msra.mxu0 0.0
    %247 = vmatprep.subr.mxu0 0.0
    %248 = vmatpush1.msra.mxu0 0.0
    %249 = vmatprep.subr.mxu0 0.0
    %250 = vmatpush1.msra.mxu0 0.0
    %251 = vmatprep.subr.mxu0 0.0
    %252 = vmatpush1.msra.mxu0 0.0
    %253 = vmatprep.subr.mxu0 0.0
    %254 = vmatpush1.msra.mxu0 0.0
    %255 = vmatprep.subr.mxu0 0.0
    %256 = vmatpush1.msra.mxu0 0.0
    %257 = vmatprep.subr.mxu0 0.0
    %258 = vmatpush1.msra.mxu0 0.0
    %259 = vmatprep.subr.mxu0 0.0
    %260 = vmatpush1.msra.mxu0 0.0
    %261 = vmatprep.subr.mxu0 0.0
    %262 = vmatpush1.msra.mxu0 0.0
    %263 = vmatprep.subr.mxu0 0.0
    %264 = vmatpush1.msra.mxu0 0.0
    %265 = vmatprep.subr.mxu0 0.0
    %266 = vmatpush1.msra.mxu0 0.0
    %267 = vmatprep.subr.mxu0 0.0
    %268 = vmatpush1.msra.mxu0 0.0
    %269 = vmatprep.subr.mxu0 0.0
    %270 = vmatpush1.msra.mxu0 0.0
    %271 = vmatprep.subr.mxu0 0.0
    %272 = vmatpush1.msra.mxu0 0.0
    %273 = vmatprep.subr.mxu0 0.0
    %274 = vmatpush1.msra.mxu0 0.0
    %275 = vmatprep.subr.mxu0 0.0
    %276 = vmatpush1.msra.mxu0 0.0
    %277 = vmatprep.mubr.f32.mxu0 0.0
    %278 = vmatmul.mubr.f32.gmra.mrb[0].mxu0 %v85
    %v279 = vpop.f32.mrb[0].mxu0
    %v280 = vadd.f32 %v200, %v279
    %v281 = vpop.f32.mrb[0].mxu0
    %282 = vmatprep.mubr.f32.mxu0 0.0
    %283 = vmatmul.mubr.f32.gmra.mrb[0].mxu0 %v86
    %v284 = vpop.f32.mrb[0].mxu0
    %v285 = vadd.f32 %v205, %v284
    %v286 = vpop.f32.mrb[0].mxu0
    %287 = vmatprep.mubr.f32.mxu0 0.0
    %288 = vmatmul.mubr.f32.gmra.mrb[0].mxu0 %v87
    %v289 = vpop.f32.mrb[0].mxu0
    %v290 = vadd.f32 %v210, %v289
    %v291 = vpop.f32.mrb[0].mxu0
    %292 = vdwg.mxu0
    %s293 = scalar_lea.vmem %s1, 256
    %v294 = vld [vmem:[%s293] sm:$0xff]
    %v295 = vld [vmem:[%s293 + $0x8] sm:$0xff]
    %v296 = vld [vmem:[%s293 + $0x10] sm:$0xff]
    %v297 = vld [vmem:[%s293 + $0x18] sm:$0xff]
    %v298 = vld [vmem:[%s293 + $0x20] sm:$0xff]
    %v299 = vld [vmem:[%s293 + $0x28] sm:$0xff]
    %v300 = vld [vmem:[%s293 + $0x30] sm:$0xff]
    %v301 = vld [vmem:[%s293 + $0x38] sm:$0xff]
    %v302 = vld [vmem:[%s293 + $0x40] sm:$0xff]
    %v303 = vld [vmem:[%s293 + $0x48] sm:$0xff]
    %v304 = vld [vmem:[%s293 + $0x50] sm:$0xff]
    %v305 = vld [vmem:[%s293 + $0x58] sm:$0xff]
    %v306 = vld [vmem:[%s293 + $0x60] sm:$0xff]
    %v307 = vld [vmem:[%s293 + $0x68] sm:$0xff]
    %v308 = vld [vmem:[%s293 + $0x70] sm:$0xff]
    %v309 = vld [vmem:[%s293 + $0x78] sm:$0xff]
    %vm310 = vcmask 1045504
    %v311 = vrot.slane %v85, 2
    %v312 = vrot.slane %v86, 2
    %v313 = vsel %vm310, %v311, %v312
    %v314 = vrot.slane %v87, 2
    %v315 = vsel %vm310, %v312, %v314
    %319 = vmatprep.subr.mxu0 0.0
    %320 = vmatpush1.msra.mxu0 %v294
    %321 = vmatprep.subr.mxu0 0.0
    %322 = vmatpush1.msra.mxu0 %v295
    %323 = vmatprep.subr.mxu0 0.0
    %324 = vmatpush1.msra.mxu0 %v296
    %325 = vmatprep.subr.mxu0 0.0
    %326 = vmatpush1.msra.mxu0 %v297
    %327 = vmatprep.subr.mxu0 0.0
    %328 = vmatpush1.msra.mxu0 %v298
    %329 = vmatprep.subr.mxu0 0.0
    %330 = vmatpush1.msra.mxu0 %v299
    %331 = vmatprep.subr.mxu0 0.0
    %332 = vmatpush1.msra.mxu0 %v300
    %333 = vmatprep.subr.mxu0 0.0
    %334 = vmatpush1.msra.mxu0 %v301
    %335 = vmatprep.subr.mxu0 0.0
    %336 = vmatpush1.msra.mxu0 %v302
    %337 = vmatprep.subr.mxu0 0.0
    %338 = vmatpush1.msra.mxu0 %v303
    %339 = vmatprep.subr.mxu0 0.0
    %340 = vmatpush1.msra.mxu0 %v304
    %341 = vmatprep.subr.mxu0 0.0
    %342 = vmatpush1.msra.mxu0 %v305
    %343 = vmatprep.subr.mxu0 0.0
    %344 = vmatpush1.msra.mxu0 %v306
    %345 = vmatprep.subr.mxu0 0.0
    %346 = vmatpush1.msra.mxu0 %v307
    %347 = vmatprep.subr.mxu0 0.0
    %348 = vmatpush1.msra.mxu0 %v308
    %349 = vmatprep.subr.mxu0 0.0
    %350 = vmatpush1.msra.mxu0 %v309
    %351 = vmatprep.subr.mxu0 0.0
    %352 = vmatpush1.msra.mxu0 0.0
    %353 = vmatprep.subr.mxu0 0.0
    %354 = vmatpush1.msra.mxu0 0.0
    %355 = vmatprep.subr.mxu0 0.0
    %356 = vmatpush1.msra.mxu0 0.0
    %357 = vmatprep.subr.mxu0 0.0
    %358 = vmatpush1.msra.mxu0 0.0
    %359 = vmatprep.subr.mxu0 0.0
    %360 = vmatpush1.msra.mxu0 0.0
    %361 = vmatprep.subr.mxu0 0.0
    %362 = vmatpush1.msra.mxu0 0.0
    %363 = vmatprep.subr.mxu0 0.0
    %364 = vmatpush1.msra.mxu0 0.0
    %365 = vmatprep.subr.mxu0 0.0
    %366 = vmatpush1.msra.mxu0 0.0
    %367 = vmatprep.subr.mxu0 0.0
    %368 = vmatpush1.msra.mxu0 0.0
    %369 = vmatprep.subr.mxu0 0.0
    %370 = vmatpush1.msra.mxu0 0.0
    %371 = vmatprep.subr.mxu0 0.0
    %372 = vmatpush1.msra.mxu0 0.0
    %373 = vmatprep.subr.mxu0 0.0
    %374 = vmatpush1.msra.mxu0 0.0
    %375 = vmatprep.subr.mxu0 0.0
    %376 = vmatpush1.msra.mxu0 0.0
    %377 = vmatprep.subr.mxu0 0.0
    %378 = vmatpush1.msra.mxu0 0.0
    %379 = vmatprep.subr.mxu0 0.0
    %380 = vmatpush1.msra.mxu0 0.0
    %381 = vmatprep.subr.mxu0 0.0
    %382 = vmatpush1.msra.mxu0 0.0
    %383 = vmatprep.mubr.f32.mxu0 0.0
    %384 = vmatmul.mubr.f32.gmra.mrb[0].mxu0 %v313
    %v385 = vpop.f32.mrb[0].mxu0
    %v386 = vadd.f32 0.0, %v385
    %v387 = vpop.f32.mrb[0].mxu0
    %388 = vmatprep.mubr.f32.mxu0 0.0
    %389 = vmatmul.mubr.f32.gmra.mrb[0].mxu0 %v315
    %v390 = vpop.f32.mrb[0].mxu0
    %v391 = vadd.f32 0.0, %v390
    %v392 = vpop.f32.mrb[0].mxu0
    %393 = vmatprep.mubr.f32.mxu0 0.0
    %394 = vmatmul.mubr.f32.gmra.mrb[0].mxu0 %v314
    %v395 = vpop.f32.mrb[0].mxu0
    %v396 = vadd.f32 0.0, %v395
    %v397 = vpop.f32.mrb[0].mxu0
    %398 = vdwg.mxu0
    %v399 = vadd.f32 %v280, %v386
    %v400 = vadd.f32 %v285, %v391
    %v401 = vadd.f32 %v290, %v396
    %v402 = vld [vmem:[%s2] sm:$0x1]
    %v404 = vlaneseq
    %v405 = vshrl.u32 %v404, 7
    %v406 = vsub.s32 0, %v405
    %v407 = vrot.slane %v402, %v406
    %v409 = vmul.f32 %v399, %v407
    %v410 = vmul.f32 %v400, %v407
    %v411 = vmul.f32 %v401, %v407
    %v412 = vld [vmem:[%s3] sm:$0x1]
    %v414 = vlaneseq
    %v415 = vshrl.u32 %v414, 7
    %v416 = vsub.s32 0, %v415
    %v417 = vrot.slane %v412, %v416
    %v419 = vadd.f32 %v409, %v417
    %v420 = vadd.f32 %v410, %v417
    %v421 = vadd.f32 %v411, %v417
    %v422 = vmax.f32 %v419, 0.0
    %v423 = vmax.f32 %v420, 0.0
    %v424 = vmax.f32 %v421, 0.0
    %v425 = vlaneseq
    %v426 = vshrl.u32 %v425, 7
    %v427 = vadd.s32 %v426, 8
    %v428 = vadd.s32 %v426, 16
    %v429 = vsub.s32 %v426, 3
    %v430 = vsub.s32 %v427, 3
    %v431 = vsub.s32 %v428, 3
    %vm432 = vcmp.ge.s32.totalorder %v429, 0
    %vm433 = vcmp.ge.s32.totalorder %v430, 0
    %vm434 = vcmp.ge.s32.totalorder %v431, 0
    %vm435 = vcmp.lt.s32.totalorder %v429, 16
    %vm436 = vcmp.lt.s32.totalorder %v430, 16
    %vm437 = vcmp.lt.s32.totalorder %v431, 16
    %vm438 = vmand %vm432, %vm435
    %vm439 = vmand %vm433, %vm436
    %vm440 = vmand %vm434, %vm437
    %v441 = vsel %vm438, 1, 0
    %v442 = vsel %vm439, 1, 0
    %v443 = vsel %vm440, 1, 0
    %vm444 = vcmp.eq.s32.totalorder %v441, 1
    %vm445 = vcmp.eq.s32.totalorder %v442, 1
    %vm446 = vcmp.eq.s32.totalorder %v443, 1
    %v447 = vsel %vm444, %v422, 0.0
    %v448 = vsel %vm445, %v423, 0.0
    %v449 = vsel %vm446, %v424, 0.0
    %v450 = vld [vmem:[#allocation2] sm:$0xff]
    %v451 = vld [vmem:[#allocation2 + $0x8] sm:$0xff]
    %v452 = vld [vmem:[#allocation2 + $0x10] sm:$0xff]
    %v453 = vld [vmem:[#allocation2 + $0x18] sm:$0xff]
    %v454 = vld [vmem:[#allocation2 + $0x20] sm:$0xff]
    %v455 = vld [vmem:[#allocation2 + $0x28] sm:$0xff]
    %v456 = vld [vmem:[#allocation2 + $0x30] sm:$0xff]
    %v457 = vld [vmem:[#allocation2 + $0x38] sm:$0xff]
    %v458 = vld [vmem:[#allocation2 + $0x40] sm:$0xff]
    %v459 = vld [vmem:[#allocation2 + $0x48] sm:$0xff]
    %v460 = vld [vmem:[#allocation2 + $0x50] sm:$0xff]
    %v461 = vld [vmem:[#allocation2 + $0x58] sm:$0xff]
    %v462 = vld [vmem:[#allocation2 + $0x60] sm:$0xff]
    %v463 = vld [vmem:[#allocation2 + $0x68] sm:$0xff]
    %v464 = vld [vmem:[#allocation2 + $0x70] sm:$0xff]
    %v465 = vld [vmem:[#allocation2 + $0x78] sm:$0xff]
    %s466 = scalar_lea.vmem [#allocation2], 128
    %v467 = vld [vmem:[%s466] sm:$0xff]
    %v468 = vld [vmem:[%s466 + $0x8] sm:$0xff]
    %v469 = vld [vmem:[%s466 + $0x10] sm:$0xff]
    %v470 = vld [vmem:[%s466 + $0x18] sm:$0xff]
    %v471 = vld [vmem:[%s466 + $0x20] sm:$0xff]
    %v472 = vld [vmem:[%s466 + $0x28] sm:$0xff]
    %v473 = vld [vmem:[%s466 + $0x30] sm:$0xff]
    %v474 = vld [vmem:[%s466 + $0x38] sm:$0xff]
    %v475 = vld [vmem:[%s466 + $0x40] sm:$0xff]
    %v476 = vld [vmem:[%s466 + $0x48] sm:$0xff]
    %v477 = vld [vmem:[%s466 + $0x50] sm:$0xff]
    %v478 = vld [vmem:[%s466 + $0x58] sm:$0xff]
    %v479 = vld [vmem:[%s466 + $0x60] sm:$0xff]
    %v480 = vld [vmem:[%s466 + $0x68] sm:$0xff]
    %v481 = vld [vmem:[%s466 + $0x70] sm:$0xff]
    %v482 = vld [vmem:[%s466 + $0x78] sm:$0xff]
    %v486 = vrot.slane %v447, 1
    %v487 = vrot.slane %v448, 1
    %v488 = vsel %vm124, %v486, %v487
    %v489 = vrot.slane %v449, 1
    %v490 = vsel %vm124, %v487, %v489
    %494 = vmatprep.subr.mxu0 0.0
    %495 = vmatpush1.msra.mxu0 %v467
    %496 = vmatprep.subr.mxu0 0.0
    %497 = vmatpush1.msra.mxu0 %v468
    %498 = vmatprep.subr.mxu0 0.0
    %499 = vmatpush1.msra.mxu0 %v469
    %500 = vmatprep.subr.mxu0 0.0
    %501 = vmatpush1.msra.mxu0 %v470
    %502 = vmatprep.subr.mxu0 0.0
    %503 = vmatpush1.msra.mxu0 %v471
    %504 = vmatprep.subr.mxu0 0.0
    %505 = vmatpush1.msra.mxu0 %v472
    %506 = vmatprep.subr.mxu0 0.0
    %507 = vmatpush1.msra.mxu0 %v473
    %508 = vmatprep.subr.mxu0 0.0
    %509 = vmatpush1.msra.mxu0 %v474
    %510 = vmatprep.subr.mxu0 0.0
    %511 = vmatpush1.msra.mxu0 %v475
    %512 = vmatprep.subr.mxu0 0.0
    %513 = vmatpush1.msra.mxu0 %v476
    %514 = vmatprep.subr.mxu0 0.0
    %515 = vmatpush1.msra.mxu0 %v477
    %516 = vmatprep.subr.mxu0 0.0
    %517 = vmatpush1.msra.mxu0 %v478
    %518 = vmatprep.subr.mxu0 0.0
    %519 = vmatpush1.msra.mxu0 %v479
    %520 = vmatprep.subr.mxu0 0.0
    %521 = vmatpush1.msra.mxu0 %v480
    %522 = vmatprep.subr.mxu0 0.0
    %523 = vmatpush1.msra.mxu0 %v481
    %524 = vmatprep.subr.mxu0 0.0
    %525 = vmatpush1.msra.mxu0 %v482
    %526 = vmatprep.subr.mxu0 0.0
    %527 = vmatpush1.msra.mxu0 0.0
    %528 = vmatprep.subr.mxu0 0.0
    %529 = vmatpush1.msra.mxu0 0.0
    %530 = vmatprep.subr.mxu0 0.0
    %531 = vmatpush1.msra.mxu0 0.0
    %532 = vmatprep.subr.mxu0 0.0
    %533 = vmatpush1.msra.mxu0 0.0
    %534 = vmatprep.subr.mxu0 0.0
    %535 = vmatpush1.msra.mxu0 0.0
    %536 = vmatprep.subr.mxu0 0.0
    %537 = vmatpush1.msra.mxu0 0.0
    %538 = vmatprep.subr.mxu0 0.0
    %539 = vmatpush1.msra.mxu0 0.0
    %540 = vmatprep.subr.mxu0 0.0
    %541 = vmatpush1.msra.mxu0 0.0
    %542 = vmatprep.subr.mxu0 0.0
    %543 = vmatpush1.msra.mxu0 0.0
    %544 = vmatprep.subr.mxu0 0.0
    %545 = vmatpush1.msra.mxu0 0.0
    %546 = vmatprep.subr.mxu0 0.0
    %547 = vmatpush1.msra.mxu0 0.0
    %548 = vmatprep.subr.mxu0 0.0
    %549 = vmatpush1.msra.mxu0 0.0
    %550 = vmatprep.subr.mxu0 0.0
    %551 = vmatpush1.msra.mxu0 0.0
    %552 = vmatprep.subr.mxu0 0.0
    %553 = vmatpush1.msra.mxu0 0.0
    %554 = vmatprep.subr.mxu0 0.0
    %555 = vmatpush1.msra.mxu0 0.0
    %556 = vmatprep.subr.mxu0 0.0
    %557 = vmatpush1.msra.mxu0 0.0
    %558 = vmatprep.mubr.f32.mxu0 0.0
    %559 = vmatmul.mubr.f32.gmra.mrb[0].mxu0 %v488
    %v560 = vpop.f32.mrb[0].mxu0
    %v561 = vadd.f32 0.0, %v560
    %v562 = vpop.f32.mrb[0].mxu0
    %563 = vmatprep.mubr.f32.mxu0 0.0
    %564 = vmatmul.mubr.f32.gmra.mrb[0].mxu0 %v490
    %v565 = vpop.f32.mrb[0].mxu0
    %v566 = vadd.f32 0.0, %v565
    %v567 = vpop.f32.mrb[0].mxu0
    %568 = vmatprep.mubr.f32.mxu0 0.0
    %569 = vmatmul.mubr.f32.gmra.mrb[0].mxu0 %v489
    %v570 = vpop.f32.mrb[0].mxu0
    %v571 = vadd.f32 0.0, %v570
    %v572 = vpop.f32.mrb[0].mxu0
    %573 = vdwg.mxu0
    %574 = vmatprep.subr.mxu0 0.0
    %575 = vmatpush1.msra.mxu0 %v450
    %576 = vmatprep.subr.mxu0 0.0
    %577 = vmatpush1.msra.mxu0 %v451
    %578 = vmatprep.subr.mxu0 0.0
    %579 = vmatpush1.msra.mxu0 %v452
    %580 = vmatprep.subr.mxu0 0.0
    %581 = vmatpush1.msra.mxu0 %v453
    %582 = vmatprep.subr.mxu0 0.0
    %583 = vmatpush1.msra.mxu0 %v454
    %584 = vmatprep.subr.mxu0 0.0
    %585 = vmatpush1.msra.mxu0 %v455
    %586 = vmatprep.subr.mxu0 0.0
    %587 = vmatpush1.msra.mxu0 %v456
    %588 = vmatprep.subr.mxu0 0.0
    %589 = vmatpush1.msra.mxu0 %v457
    %590 = vmatprep.subr.mxu0 0.0
    %591 = vmatpush1.msra.mxu0 %v458
    %592 = vmatprep.subr.mxu0 0.0
    %593 = vmatpush1.msra.mxu0 %v459
    %594 = vmatprep.subr.mxu0 0.0
    %595 = vmatpush1.msra.mxu0 %v460
    %596 = vmatprep.subr.mxu0 0.0
    %597 = vmatpush1.msra.mxu0 %v461
    %598 = vmatprep.subr.mxu0 0.0
    %599 = vmatpush1.msra.mxu0 %v462
    %600 = vmatprep.subr.mxu0 0.0
    %601 = vmatpush1.msra.mxu0 %v463
    %602 = vmatprep.subr.mxu0 0.0
    %603 = vmatpush1.msra.mxu0 %v464
    %604 = vmatprep.subr.mxu0 0.0
    %605 = vmatpush1.msra.mxu0 %v465
    %606 = vmatprep.subr.mxu0 0.0
    %607 = vmatpush1.msra.mxu0 0.0
    %608 = vmatprep.subr.mxu0 0.0
    %609 = vmatpush1.msra.mxu0 0.0
    %610 = vmatprep.subr.mxu0 0.0
    %611 = vmatpush1.msra.mxu0 0.0
    %612 = vmatprep.subr.mxu0 0.0
    %613 = vmatpush1.msra.mxu0 0.0
    %614 = vmatprep.subr.mxu0 0.0
    %615 = vmatpush1.msra.mxu0 0.0
    %616 = vmatprep.subr.mxu0 0.0
    %617 = vmatpush1.msra.mxu0 0.0
    %618 = vmatprep.subr.mxu0 0.0
    %619 = vmatpush1.msra.mxu0 0.0
    %620 = vmatprep.subr.mxu0 0.0
    %621 = vmatpush1.msra.mxu0 0.0
    %622 = vmatprep.subr.mxu0 0.0
    %623 = vmatpush1.msra.mxu0 0.0
    %624 = vmatprep.subr.mxu0 0.0
    %625 = vmatpush1.msra.mxu0 0.0
    %626 = vmatprep.subr.mxu0 0.0
    %627 = vmatpush1.msra.mxu0 0.0
    %628 = vmatprep.subr.mxu0 0.0
    %629 = vmatpush1.msra.mxu0 0.0
    %630 = vmatprep.subr.mxu0 0.0
    %631 = vmatpush1.msra.mxu0 0.0
    %632 = vmatprep.subr.mxu0 0.0
    %633 = vmatpush1.msra.mxu0 0.0
    %634 = vmatprep.subr.mxu0 0.0
    %635 = vmatpush1.msra.mxu0 0.0
    %636 = vmatprep.subr.mxu0 0.0
    %637 = vmatpush1.msra.mxu0 0.0
    %638 = vmatprep.mubr.f32.mxu0 0.0
    %639 = vmatmul.mubr.f32.gmra.mrb[0].mxu0 %v447
    %v640 = vpop.f32.mrb[0].mxu0
    %v641 = vadd.f32 %v561, %v640
    %v642 = vpop.f32.mrb[0].mxu0
    %643 = vmatprep.mubr.f32.mxu0 0.0
    %644 = vmatmul.mubr.f32.gmra.mrb[0].mxu0 %v448
    %v645 = vpop.f32.mrb[0].mxu0
    %v646 = vadd.f32 %v566, %v645
    %v647 = vpop.f32.mrb[0].mxu0
    %648 = vmatprep.mubr.f32.mxu0 0.0
    %649 = vmatmul.mubr.f32.gmra.mrb[0].mxu0 %v449
    %v650 = vpop.f32.mrb[0].mxu0
    %v651 = vadd.f32 %v571, %v650
    %v652 = vpop.f32.mrb[0].mxu0
    %653 = vdwg.mxu0
    %s654 = scalar_lea.vmem [#allocation2], 256
    %v655 = vld [vmem:[%s654] sm:$0xff]
    %v656 = vld [vmem:[%s654 + $0x8] sm:$0xff]
    %v657 = vld [vmem:[%s654 + $0x10] sm:$0xff]
    %v658 = vld [vmem:[%s654 + $0x18] sm:$0xff]
    %v659 = vld [vmem:[%s654 + $0x20] sm:$0xff]
    %v660 = vld [vmem:[%s654 + $0x28] sm:$0xff]
    %v661 = vld [vmem:[%s654 + $0x30] sm:$0xff]
    %v662 = vld [vmem:[%s654 + $0x38] sm:$0xff]
    %v663 = vld [vmem:[%s654 + $0x40] sm:$0xff]
    %v664 = vld [vmem:[%s654 + $0x48] sm:$0xff]
    %v665 = vld [vmem:[%s654 + $0x50] sm:$0xff]
    %v666 = vld [vmem:[%s654 + $0x58] sm:$0xff]
    %v667 = vld [vmem:[%s654 + $0x60] sm:$0xff]
    %v668 = vld [vmem:[%s654 + $0x68] sm:$0xff]
    %v669 = vld [vmem:[%s654 + $0x70] sm:$0xff]
    %v670 = vld [vmem:[%s654 + $0x78] sm:$0xff]
    %v671 = vrot.slane %v447, 2
    %v672 = vrot.slane %v448, 2
    %v673 = vsel %vm310, %v671, %v672
    %v674 = vrot.slane %v449, 2
    %v675 = vsel %vm310, %v672, %v674
    %679 = vmatprep.subr.mxu0 0.0
    %680 = vmatpush1.msra.mxu0 %v655
    %681 = vmatprep.subr.mxu0 0.0
    %682 = vmatpush1.msra.mxu0 %v656
    %683 = vmatprep.subr.mxu0 0.0
    %684 = vmatpush1.msra.mxu0 %v657
    %685 = vmatprep.subr.mxu0 0.0
    %686 = vmatpush1.msra.mxu0 %v658
    %687 = vmatprep.subr.mxu0 0.0
    %688 = vmatpush1.msra.mxu0 %v659
    %689 = vmatprep.subr.mxu0 0.0
    %690 = vmatpush1.msra.mxu0 %v660
    %691 = vmatprep.subr.mxu0 0.0
    %692 = vmatpush1.msra.mxu0 %v661
    %693 = vmatprep.subr.mxu0 0.0
    %694 = vmatpush1.msra.mxu0 %v662
    %695 = vmatprep.subr.mxu0 0.0
    %696 = vmatpush1.msra.mxu0 %v663
    %697 = vmatprep.subr.mxu0 0.0
    %698 = vmatpush1.msra.mxu0 %v664
    %699 = vmatprep.subr.mxu0 0.0
    %700 = vmatpush1.msra.mxu0 %v665
    %701 = vmatprep.subr.mxu0 0.0
    %702 = vmatpush1.msra.mxu0 %v666
    %703 = vmatprep.subr.mxu0 0.0
    %704 = vmatpush1.msra.mxu0 %v667
    %705 = vmatprep.subr.mxu0 0.0
    %706 = vmatpush1.msra.mxu0 %v668
    %707 = vmatprep.subr.mxu0 0.0
    %708 = vmatpush1.msra.mxu0 %v669
    %709 = vmatprep.subr.mxu0 0.0
    %710 = vmatpush1.msra.mxu0 %v670
    %711 = vmatprep.subr.mxu0 0.0
    %712 = vmatpush1.msra.mxu0 0.0
    %713 = vmatprep.subr.mxu0 0.0
    %714 = vmatpush1.msra.mxu0 0.0
    %715 = vmatprep.subr.mxu0 0.0
    %716 = vmatpush1.msra.mxu0 0.0
    %717 = vmatprep.subr.mxu0 0.0
    %718 = vmatpush1.msra.mxu0 0.0
    %719 = vmatprep.subr.mxu0 0.0
    %720 = vmatpush1.msra.mxu0 0.0
    %721 = vmatprep.subr.mxu0 0.0
    %722 = vmatpush1.msra.mxu0 0.0
    %723 = vmatprep.subr.mxu0 0.0
    %724 = vmatpush1.msra.mxu0 0.0
    %725 = vmatprep.subr.mxu0 0.0
    %726 = vmatpush1.msra.mxu0 0.0
    %727 = vmatprep.subr.mxu0 0.0
    %728 = vmatpush1.msra.mxu0 0.0
    %729 = vmatprep.subr.mxu0 0.0
    %730 = vmatpush1.msra.mxu0 0.0
    %731 = vmatprep.subr.mxu0 0.0
    %732 = vmatpush1.msra.mxu0 0.0
    %733 = vmatprep.subr.mxu0 0.0
    %734 = vmatpush1.msra.mxu0 0.0
    %735 = vmatprep.subr.mxu0 0.0
    %736 = vmatpush1.msra.mxu0 0.0
    %737 = vmatprep.subr.mxu0 0.0
    %738 = vmatpush1.msra.mxu0 0.0
    %739 = vmatprep.subr.mxu0 0.0
    %740 = vmatpush1.msra.mxu0 0.0
    %741 = vmatprep.subr.mxu0 0.0
    %742 = vmatpush1.msra.mxu0 0.0
    %743 = vmatprep.mubr.f32.mxu0 0.0
    %744 = vmatmul.mubr.f32.gmra.mrb[0].mxu0 %v673
    %v745 = vpop.f32.mrb[0].mxu0
    %v746 = vadd.f32 0.0, %v745
    %v747 = vpop.f32.mrb[0].mxu0
    %748 = vmatprep.mubr.f32.mxu0 0.0
    %749 = vmatmul.mubr.f32.gmra.mrb[0].mxu0 %v675
    %v750 = vpop.f32.mrb[0].mxu0
    %v751 = vadd.f32 0.0, %v750
    %v752 = vpop.f32.mrb[0].mxu0
    %753 = vmatprep.mubr.f32.mxu0 0.0
    %754 = vmatmul.mubr.f32.gmra.mrb[0].mxu0 %v674
    %v755 = vpop.f32.mrb[0].mxu0
    %v756 = vadd.f32 0.0, %v755
    %v757 = vpop.f32.mrb[0].mxu0
    %758 = vdwg.mxu0
    %v759 = vadd.f32 %v641, %v746
    %v760 = vadd.f32 %v646, %v751
    %v761 = vadd.f32 %v651, %v756
    %v762 = vld [vmem:[%s5] sm:$0x1]
    %v764 = vlaneseq
    %v765 = vshrl.u32 %v764, 7
    %v766 = vsub.s32 0, %v765
    %v767 = vrot.slane %v762, %v766
    %v769 = vmul.f32 %v759, %v767
    %v770 = vmul.f32 %v760, %v767
    %v771 = vmul.f32 %v761, %v767
    %v772 = vld [vmem:[%s6] sm:$0x1]
    %v774 = vlaneseq
    %v775 = vshrl.u32 %v774, 7
    %v776 = vsub.s32 0, %v775
    %v777 = vrot.slane %v772, %v776
    %v779 = vadd.f32 %v769, %v777
    %v780 = vadd.f32 %v770, %v777
    %v781 = vadd.f32 %v771, %v777
    %v782 = vadd.f32 %v779, %v313
    %v783 = vadd.f32 %v780, %v315
    %v784 = vadd.f32 %v781, %v314
    %v785 = vmax.f32 %v782, 0.0
    %v786 = vmax.f32 %v783, 0.0
    %v787 = vmax.f32 %v784, 0.0
    %v788 = vsub.s32 %v426, 2
    %v789 = vsub.s32 %v427, 2
    %v790 = vsub.s32 %v428, 2
    %vm791 = vcmp.ge.s32.totalorder %v788, 0
    %vm792 = vcmp.ge.s32.totalorder %v789, 0
    %vm793 = vcmp.ge.s32.totalorder %v790, 0
    %vm794 = vcmp.lt.s32.totalorder %v788, 16
    %vm795 = vcmp.lt.s32.totalorder %v789, 16
    %vm796 = vcmp.lt.s32.totalorder %v790, 16
    %vm797 = vmand %vm791, %vm794
    %vm798 = vmand %vm792, %vm795
    %vm799 = vmand %vm793, %vm796
    %v800 = vsel %vm797, 1, 0
    %v801 = vsel %vm798, 1, 0
    %v802 = vsel %vm799, 1, 0
    %vm803 = vcmp.eq.s32.totalorder %v800, 1
    %vm804 = vcmp.eq.s32.totalorder %v801, 1
    %vm805 = vcmp.eq.s32.totalorder %v802, 1
    %v806 = vsel %vm803, %v785, 0.0
    %v807 = vsel %vm804, %v786, 0.0
    %v808 = vsel %vm805, %v787, 0.0
    %v809 = vld [vmem:[#allocation4] sm:$0xff]
    %v810 = vld [vmem:[#allocation4 + $0x8] sm:$0xff]
    %v811 = vld [vmem:[#allocation4 + $0x10] sm:$0xff]
    %v812 = vld [vmem:[#allocation4 + $0x18] sm:$0xff]
    %v813 = vld [vmem:[#allocation4 + $0x20] sm:$0xff]
    %v814 = vld [vmem:[#allocation4 + $0x28] sm:$0xff]
    %v815 = vld [vmem:[#allocation4 + $0x30] sm:$0xff]
    %v816 = vld [vmem:[#allocation4 + $0x38] sm:$0xff]
    %v817 = vld [vmem:[#allocation4 + $0x40] sm:$0xff]
    %v818 = vld [vmem:[#allocation4 + $0x48] sm:$0xff]
    %v819 = vld [vmem:[#allocation4 + $0x50] sm:$0xff]
    %v820 = vld [vmem:[#allocation4 + $0x58] sm:$0xff]
    %v821 = vld [vmem:[#allocation4 + $0x60] sm:$0xff]
    %v822 = vld [vmem:[#allocation4 + $0x68] sm:$0xff]
    %v823 = vld [vmem:[#allocation4 + $0x70] sm:$0xff]
    %v824 = vld [vmem:[#allocation4 + $0x78] sm:$0xff]
    %s825 = scalar_lea.vmem [#allocation4], 128
    %v826 = vld [vmem:[%s825] sm:$0xff]
    %v827 = vld [vmem:[%s825 + $0x8] sm:$0xff]
    %v828 = vld [vmem:[%s825 + $0x10] sm:$0xff]
    %v829 = vld [vmem:[%s825 + $0x18] sm:$0xff]
    %v830 = vld [vmem:[%s825 + $0x20] sm:$0xff]
    %v831 = vld [vmem:[%s825 + $0x28] sm:$0xff]
    %v832 = vld [vmem:[%s825 + $0x30] sm:$0xff]
    %v833 = vld [vmem:[%s825 + $0x38] sm:$0xff]
    %v834 = vld [vmem:[%s825 + $0x40] sm:$0xff]
    %v835 = vld [vmem:[%s825 + $0x48] sm:$0xff]
    %v836 = vld [vmem:[%s825 + $0x50] sm:$0xff]
    %v837 = vld [vmem:[%s825 + $0x58] sm:$0xff]
    %v838 = vld [vmem:[%s825 + $0x60] sm:$0xff]
    %v839 = vld [vmem:[%s825 + $0x68] sm:$0xff]
    %v840 = vld [vmem:[%s825 + $0x70] sm:$0xff]
    %v841 = vld [vmem:[%s825 + $0x78] sm:$0xff]
    %v845 = vrot.slane %v806, 1
    %v846 = vrot.slane %v807, 1
    %v847 = vsel %vm124, %v845, %v846
    %v848 = vrot.slane %v808, 1
    %v849 = vsel %vm124, %v846, %v848
    %853 = vmatprep.subr.mxu0 0.0
    %854 = vmatpush1.msra.mxu0 %v826
    %855 = vmatprep.subr.mxu0 0.0
    %856 = vmatpush1.msra.mxu0 %v827
    %857 = vmatprep.subr.mxu0 0.0
    %858 = vmatpush1.msra.mxu0 %v828
    %859 = vmatprep.subr.mxu0 0.0
    %860 = vmatpush1.msra.mxu0 %v829
    %861 = vmatprep.subr.mxu0 0.0
    %862 = vmatpush1.msra.mxu0 %v830
    %863 = vmatprep.subr.mxu0 0.0
    %864 = vmatpush1.msra.mxu0 %v831
    %865 = vmatprep.subr.mxu0 0.0
    %866 = vmatpush1.msra.mxu0 %v832
    %867 = vmatprep.subr.mxu0 0.0
    %868 = vmatpush1.msra.mxu0 %v833
    %869 = vmatprep.subr.mxu0 0.0
    %870 = vmatpush1.msra.mxu0 %v834
    %871 = vmatprep.subr.mxu0 0.0
    %872 = vmatpush1.msra.mxu0 %v835
    %873 = vmatprep.subr.mxu0 0.0
    %874 = vmatpush1.msra.mxu0 %v836
    %875 = vmatprep.subr.mxu0 0.0
    %876 = vmatpush1.msra.mxu0 %v837
    %877 = vmatprep.subr.mxu0 0.0
    %878 = vmatpush1.msra.mxu0 %v838
    %879 = vmatprep.subr.mxu0 0.0
    %880 = vmatpush1.msra.mxu0 %v839
    %881 = vmatprep.subr.mxu0 0.0
    %882 = vmatpush1.msra.mxu0 %v840
    %883 = vmatprep.subr.mxu0 0.0
    %884 = vmatpush1.msra.mxu0 %v841
    %885 = vmatprep.subr.mxu0 0.0
    %886 = vmatpush1.msra.mxu0 0.0
    %887 = vmatprep.subr.mxu0 0.0
    %888 = vmatpush1.msra.mxu0 0.0
    %889 = vmatprep.subr.mxu0 0.0
    %890 = vmatpush1.msra.mxu0 0.0
    %891 = vmatprep.subr.mxu0 0.0
    %892 = vmatpush1.msra.mxu0 0.0
    %893 = vmatprep.subr.mxu0 0.0
    %894 = vmatpush1.msra.mxu0 0.0
    %895 = vmatprep.subr.mxu0 0.0
    %896 = vmatpush1.msra.mxu0 0.0
    %897 = vmatprep.subr.mxu0 0.0
    %898 = vmatpush1.msra.mxu0 0.0
    %899 = vmatprep.subr.mxu0 0.0
    %900 = vmatpush1.msra.mxu0 0.0
    %901 = vmatprep.subr.mxu0 0.0
    %902 = vmatpush1.msra.mxu0 0.0
    %903 = vmatprep.subr.mxu0 0.0
    %904 = vmatpush1.msra.mxu0 0.0
    %905 = vmatprep.subr.mxu0 0.0
    %906 = vmatpush1.msra.mxu0 0.0
    %907 = vmatprep.subr.mxu0 0.0
    %908 = vmatpush1.msra.mxu0 0.0
    %909 = vmatprep.subr.mxu0 0.0
    %910 = vmatpush1.msra.mxu0 0.0
    %911 = vmatprep.subr.mxu0 0.0
    %912 = vmatpush1.msra.mxu0 0.0
    %913 = vmatprep.subr.mxu0 0.0
    %914 = vmatpush1.msra.mxu0 0.0
    %915 = vmatprep.subr.mxu0 0.0
    %916 = vmatpush1.msra.mxu0 0.0
    %917 = vmatprep.mubr.f32.mxu0 0.0
    %918 = vmatmul.mubr.f32.gmra.mrb[0].mxu0 %v847
    %v919 = vpop.f32.mrb[0].mxu0
    %v920 = vadd.f32 0.0, %v919
    %v921 = vpop.f32.mrb[0].mxu0
    %922 = vmatprep.mubr.f32.mxu0 0.0
    %923 = vmatmul.mubr.f32.gmra.mrb[0].mxu0 %v849
    %v924 = vpop.f32.mrb[0].mxu0
    %v925 = vadd.f32 0.0, %v924
    %v926 = vpop.f32.mrb[0].mxu0
    %927 = vmatprep.mubr.f32.mxu0 0.0
    %928 = vmatmul.mubr.f32.gmra.mrb[0].mxu0 %v848
    %v929 = vpop.f32.mrb[0].mxu0
    %v930 = vadd.f32 0.0, %v929
    %v931 = vpop.f32.mrb[0].mxu0
    %932 = vdwg.mxu0
    %933 = vmatprep.subr.mxu0 0.0
    %934 = vmatpush1.msra.mxu0 %v809
    %935 = vmatprep.subr.mxu0 0.0
    %936 = vmatpush1.msra.mxu0 %v810
    %937 = vmatprep.subr.mxu0 0.0
    %938 = vmatpush1.msra.mxu0 %v811
    %939 = vmatprep.subr.mxu0 0.0
    %940 = vmatpush1.msra.mxu0 %v812
    %941 = vmatprep.subr.mxu0 0.0
    %942 = vmatpush1.msra.mxu0 %v813
    %943 = vmatprep.subr.mxu0 0.0
    %944 = vmatpush1.msra.mxu0 %v814
    %945 = vmatprep.subr.mxu0 0.0
    %946 = vmatpush1.msra.mxu0 %v815
    %947 = vmatprep.subr.mxu0 0.0
    %948 = vmatpush1.msra.mxu0 %v816
    %949 = vmatprep.subr.mxu0 0.0
    %950 = vmatpush1.msra.mxu0 %v817
    %951 = vmatprep.subr.mxu0 0.0
    %952 = vmatpush1.msra.mxu0 %v818
    %953 = vmatprep.subr.mxu0 0.0
    %954 = vmatpush1.msra.mxu0 %v819
    %955 = vmatprep.subr.mxu0 0.0
    %956 = vmatpush1.msra.mxu0 %v820
    %957 = vmatprep.subr.mxu0 0.0
    %958 = vmatpush1.msra.mxu0 %v821
    %959 = vmatprep.subr.mxu0 0.0
    %960 = vmatpush1.msra.mxu0 %v822
    %961 = vmatprep.subr.mxu0 0.0
    %962 = vmatpush1.msra.mxu0 %v823
    %963 = vmatprep.subr.mxu0 0.0
    %964 = vmatpush1.msra.mxu0 %v824
    %965 = vmatprep.subr.mxu0 0.0
    %966 = vmatpush1.msra.mxu0 0.0
    %967 = vmatprep.subr.mxu0 0.0
    %968 = vmatpush1.msra.mxu0 0.0
    %969 = vmatprep.subr.mxu0 0.0
    %970 = vmatpush1.msra.mxu0 0.0
    %971 = vmatprep.subr.mxu0 0.0
    %972 = vmatpush1.msra.mxu0 0.0
    %973 = vmatprep.subr.mxu0 0.0
    %974 = vmatpush1.msra.mxu0 0.0
    %975 = vmatprep.subr.mxu0 0.0
    %976 = vmatpush1.msra.mxu0 0.0
    %977 = vmatprep.subr.mxu0 0.0
    %978 = vmatpush1.msra.mxu0 0.0
    %979 = vmatprep.subr.mxu0 0.0
    %980 = vmatpush1.msra.mxu0 0.0
    %981 = vmatprep.subr.mxu0 0.0
    %982 = vmatpush1.msra.mxu0 0.0
    %983 = vmatprep.subr.mxu0 0.0
    %984 = vmatpush1.msra.mxu0 0.0
    %985 = vmatprep.subr.mxu0 0.0
    %986 = vmatpush1.msra.mxu0 0.0
    %987 = vmatprep.subr.mxu0 0.0
    %988 = vmatpush1.msra.mxu0 0.0
    %989 = vmatprep.subr.mxu0 0.0
    %990 = vmatpush1.msra.mxu0 0.0
    %991 = vmatprep.subr.mxu0 0.0
    %992 = vmatpush1.msra.mxu0 0.0
    %993 = vmatprep.subr.mxu0 0.0
    %994 = vmatpush1.msra.mxu0 0.0
    %995 = vmatprep.subr.mxu0 0.0
    %996 = vmatpush1.msra.mxu0 0.0
    %997 = vmatprep.mubr.f32.mxu0 0.0
    %998 = vmatmul.mubr.f32.gmra.mrb[0].mxu0 %v806
    %v999 = vpop.f32.mrb[0].mxu0
    %v1000 = vadd.f32 %v920, %v999
    %v1001 = vpop.f32.mrb[0].mxu0
    %1002 = vmatprep.mubr.f32.mxu0 0.0
    %1003 = vmatmul.mubr.f32.gmra.mrb[0].mxu0 %v807
    %v1004 = vpop.f32.mrb[0].mxu0
    %v1005 = vadd.f32 %v925, %v1004
    %v1006 = vpop.f32.mrb[0].mxu0
    %1007 = vmatprep.mubr.f32.mxu0 0.0
    %1008 = vmatmul.mubr.f32.gmra.mrb[0].mxu0 %v808
    %v1009 = vpop.f32.mrb[0].mxu0
    %v1010 = vadd.f32 %v930, %v1009
    %v1011 = vpop.f32.mrb[0].mxu0
    %1012 = vdwg.mxu0
    %s1013 = scalar_lea.vmem [#allocation4], 256
    %v1014 = vld [vmem:[%s1013] sm:$0xff]
    %v1015 = vld [vmem:[%s1013 + $0x8] sm:$0xff]
    %v1016 = vld [vmem:[%s1013 + $0x10] sm:$0xff]
    %v1017 = vld [vmem:[%s1013 + $0x18] sm:$0xff]
    %v1018 = vld [vmem:[%s1013 + $0x20] sm:$0xff]
    %v1019 = vld [vmem:[%s1013 + $0x28] sm:$0xff]
    %v1020 = vld [vmem:[%s1013 + $0x30] sm:$0xff]
    %v1021 = vld [vmem:[%s1013 + $0x38] sm:$0xff]
    %v1022 = vld [vmem:[%s1013 + $0x40] sm:$0xff]
    %v1023 = vld [vmem:[%s1013 + $0x48] sm:$0xff]
    %v1024 = vld [vmem:[%s1013 + $0x50] sm:$0xff]
    %v1025 = vld [vmem:[%s1013 + $0x58] sm:$0xff]
    %v1026 = vld [vmem:[%s1013 + $0x60] sm:$0xff]
    %v1027 = vld [vmem:[%s1013 + $0x68] sm:$0xff]
    %v1028 = vld [vmem:[%s1013 + $0x70] sm:$0xff]
    %v1029 = vld [vmem:[%s1013 + $0x78] sm:$0xff]
    %v1030 = vrot.slane %v806, 2
    %v1031 = vrot.slane %v807, 2
    %v1032 = vsel %vm310, %v1030, %v1031
    %v1033 = vrot.slane %v808, 2
    %v1034 = vsel %vm310, %v1031, %v1033
    %1038 = vmatprep.subr.mxu0 0.0
    %1039 = vmatpush1.msra.mxu0 %v1014
    %1040 = vmatprep.subr.mxu0 0.0
    %1041 = vmatpush1.msra.mxu0 %v1015
    %1042 = vmatprep.subr.mxu0 0.0
    %1043 = vmatpush1.msra.mxu0 %v1016
    %1044 = vmatprep.subr.mxu0 0.0
    %1045 = vmatpush1.msra.mxu0 %v1017
    %1046 = vmatprep.subr.mxu0 0.0
    %1047 = vmatpush1.msra.mxu0 %v1018
    %1048 = vmatprep.subr.mxu0 0.0
    %1049 = vmatpush1.msra.mxu0 %v1019
    %1050 = vmatprep.subr.mxu0 0.0
    %1051 = vmatpush1.msra.mxu0 %v1020
    %1052 = vmatprep.subr.mxu0 0.0
    %1053 = vmatpush1.msra.mxu0 %v1021
    %1054 = vmatprep.subr.mxu0 0.0
    %1055 = vmatpush1.msra.mxu0 %v1022
    %1056 = vmatprep.subr.mxu0 0.0
    %1057 = vmatpush1.msra.mxu0 %v1023
    %1058 = vmatprep.subr.mxu0 0.0
    %1059 = vmatpush1.msra.mxu0 %v1024
    %1060 = vmatprep.subr.mxu0 0.0
    %1061 = vmatpush1.msra.mxu0 %v1025
    %1062 = vmatprep.subr.mxu0 0.0
    %1063 = vmatpush1.msra.mxu0 %v1026
    %1064 = vmatprep.subr.mxu0 0.0
    %1065 = vmatpush1.msra.mxu0 %v1027
    %1066 = vmatprep.subr.mxu0 0.0
    %1067 = vmatpush1.msra.mxu0 %v1028
    %1068 = vmatprep.subr.mxu0 0.0
    %1069 = vmatpush1.msra.mxu0 %v1029
    %1070 = vmatprep.subr.mxu0 0.0
    %1071 = vmatpush1.msra.mxu0 0.0
    %1072 = vmatprep.subr.mxu0 0.0
    %1073 = vmatpush1.msra.mxu0 0.0
    %1074 = vmatprep.subr.mxu0 0.0
    %1075 = vmatpush1.msra.mxu0 0.0
    %1076 = vmatprep.subr.mxu0 0.0
    %1077 = vmatpush1.msra.mxu0 0.0
    %1078 = vmatprep.subr.mxu0 0.0
    %1079 = vmatpush1.msra.mxu0 0.0
    %1080 = vmatprep.subr.mxu0 0.0
    %1081 = vmatpush1.msra.mxu0 0.0
    %1082 = vmatprep.subr.mxu0 0.0
    %1083 = vmatpush1.msra.mxu0 0.0
    %1084 = vmatprep.subr.mxu0 0.0
    %1085 = vmatpush1.msra.mxu0 0.0
    %1086 = vmatprep.subr.mxu0 0.0
    %1087 = vmatpush1.msra.mxu0 0.0
    %1088 = vmatprep.subr.mxu0 0.0
    %1089 = vmatpush1.msra.mxu0 0.0
    %1090 = vmatprep.subr.mxu0 0.0
    %1091 = vmatpush1.msra.mxu0 0.0
    %1092 = vmatprep.subr.mxu0 0.0
    %1093 = vmatpush1.msra.mxu0 0.0
    %1094 = vmatprep.subr.mxu0 0.0
    %1095 = vmatpush1.msra.mxu0 0.0
    %1096 = vmatprep.subr.mxu0 0.0
    %1097 = vmatpush1.msra.mxu0 0.0
    %1098 = vmatprep.subr.mxu0 0.0
    %1099 = vmatpush1.msra.mxu0 0.0
    %1100 = vmatprep.subr.mxu0 0.0
    %1101 = vmatpush1.msra.mxu0 0.0
    %1102 = vmatprep.mubr.f32.mxu0 0.0
    %1103 = vmatmul.mubr.f32.gmra.mrb[0].mxu0 %v1032
    %v1104 = vpop.f32.mrb[0].mxu0
    %v1105 = vadd.f32 0.0, %v1104
    %v1106 = vpop.f32.mrb[0].mxu0
    %1107 = vmatprep.mubr.f32.mxu0 0.0
    %1108 = vmatmul.mubr.f32.gmra.mrb[0].mxu0 %v1034
    %v1109 = vpop.f32.mrb[0].mxu0
    %v1110 = vadd.f32 0.0, %v1109
    %v1111 = vpop.f32.mrb[0].mxu0
    %1112 = vmatprep.mubr.f32.mxu0 0.0
    %1113 = vmatmul.mubr.f32.gmra.mrb[0].mxu0 %v1033
    %v1114 = vpop.f32.mrb[0].mxu0
    %v1115 = vadd.f32 0.0, %v1114
    %v1116 = vpop.f32.mrb[0].mxu0
    %1117 = vdwg.mxu0
    %v1118 = vadd.f32 %v1000, %v1105
    %v1119 = vadd.f32 %v1005, %v1110
    %v1120 = vadd.f32 %v1010, %v1115
    %v1121 = vld [vmem:[%s8] sm:$0x1]
    %v1123 = vlaneseq
    %v1124 = vshrl.u32 %v1123, 7
    %v1125 = vsub.s32 0, %v1124
    %v1126 = vrot.slane %v1121, %v1125
    %v1128 = vmul.f32 %v1118, %v1126
    %v1129 = vmul.f32 %v1119, %v1126
    %v1130 = vmul.f32 %v1120, %v1126
    %v1131 = vld [vmem:[%s9] sm:$0x1]
    %v1133 = vlaneseq
    %v1134 = vshrl.u32 %v1133, 7
    %v1135 = vsub.s32 0, %v1134
    %v1136 = vrot.slane %v1131, %v1135
    %v1138 = vadd.f32 %v1128, %v1136
    %v1139 = vadd.f32 %v1129, %v1136
    %v1140 = vadd.f32 %v1130, %v1136
    %v1141 = vmax.f32 %v1138, 0.0
    %v1142 = vmax.f32 %v1139, 0.0
    %v1143 = vmax.f32 %v1140, 0.0
    %v1144 = vsub.s32 %v426, 1
    %v1145 = vsub.s32 %v427, 1
    %v1146 = vsub.s32 %v428, 1
    %vm1147 = vcmp.ge.s32.totalorder %v1144, 0
    %vm1148 = vcmp.ge.s32.totalorder %v1145, 0
    %vm1149 = vcmp.ge.s32.totalorder %v1146, 0
    %vm1150 = vcmp.lt.s32.totalorder %v1144, 16
    %vm1151 = vcmp.lt.s32.totalorder %v1145, 16
    %vm1152 = vcmp.lt.s32.totalorder %v1146, 16
    %vm1153 = vmand %vm1147, %vm1150
    %vm1154 = vmand %vm1148, %vm1151
    %vm1155 = vmand %vm1149, %vm1152
    %v1156 = vsel %vm1153, 1, 0
    %v1157 = vsel %vm1154, 1, 0
    %v1158 = vsel %vm1155, 1, 0
    %vm1159 = vcmp.eq.s32.totalorder %v1156, 1
    %vm1160 = vcmp.eq.s32.totalorder %v1157, 1
    %vm1161 = vcmp.eq.s32.totalorder %v1158, 1
    %v1162 = vsel %vm1159, %v1141, 0.0
    %v1163 = vsel %vm1160, %v1142, 0.0
    %v1164 = vsel %vm1161, %v1143, 0.0
    %v1165 = vld [vmem:[#allocation6] sm:$0xff]
    %v1166 = vld [vmem:[#allocation6 + $0x8] sm:$0xff]
    %v1167 = vld [vmem:[#allocation6 + $0x10] sm:$0xff]
    %v1168 = vld [vmem:[#allocation6 + $0x18] sm:$0xff]
    %v1169 = vld [vmem:[#allocation6 + $0x20] sm:$0xff]
    %v1170 = vld [vmem:[#allocation6 + $0x28] sm:$0xff]
    %v1171 = vld [vmem:[#allocation6 + $0x30] sm:$0xff]
    %v1172 = vld [vmem:[#allocation6 + $0x38] sm:$0xff]
    %v1173 = vld [vmem:[#allocation6 + $0x40] sm:$0xff]
    %v1174 = vld [vmem:[#allocation6 + $0x48] sm:$0xff]
    %v1175 = vld [vmem:[#allocation6 + $0x50] sm:$0xff]
    %v1176 = vld [vmem:[#allocation6 + $0x58] sm:$0xff]
    %v1177 = vld [vmem:[#allocation6 + $0x60] sm:$0xff]
    %v1178 = vld [vmem:[#allocation6 + $0x68] sm:$0xff]
    %v1179 = vld [vmem:[#allocation6 + $0x70] sm:$0xff]
    %v1180 = vld [vmem:[#allocation6 + $0x78] sm:$0xff]
    %s1181 = scalar_lea.vmem [#allocation6], 128
    %v1182 = vld [vmem:[%s1181] sm:$0xff]
    %v1183 = vld [vmem:[%s1181 + $0x8] sm:$0xff]
    %v1184 = vld [vmem:[%s1181 + $0x10] sm:$0xff]
    %v1185 = vld [vmem:[%s1181 + $0x18] sm:$0xff]
    %v1186 = vld [vmem:[%s1181 + $0x20] sm:$0xff]
    %v1187 = vld [vmem:[%s1181 + $0x28] sm:$0xff]
    %v1188 = vld [vmem:[%s1181 + $0x30] sm:$0xff]
    %v1189 = vld [vmem:[%s1181 + $0x38] sm:$0xff]
    %v1190 = vld [vmem:[%s1181 + $0x40] sm:$0xff]
    %v1191 = vld [vmem:[%s1181 + $0x48] sm:$0xff]
    %v1192 = vld [vmem:[%s1181 + $0x50] sm:$0xff]
    %v1193 = vld [vmem:[%s1181 + $0x58] sm:$0xff]
    %v1194 = vld [vmem:[%s1181 + $0x60] sm:$0xff]
    %v1195 = vld [vmem:[%s1181 + $0x68] sm:$0xff]
    %v1196 = vld [vmem:[%s1181 + $0x70] sm:$0xff]
    %v1197 = vld [vmem:[%s1181 + $0x78] sm:$0xff]
    %v1201 = vrot.slane %v1162, 1
    %v1202 = vrot.slane %v1163, 1
    %v1203 = vsel %vm124, %v1201, %v1202
    %v1204 = vrot.slane %v1164, 1
    %v1205 = vsel %vm124, %v1202, %v1204
    %1208 = vmatprep.subr.mxu0 0.0
    %1209 = vmatpush1.msra.mxu0 %v1182
    %1210 = vmatprep.subr.mxu0 0.0
    %1211 = vmatpush1.msra.mxu0 %v1183
    %1212 = vmatprep.subr.mxu0 0.0
    %1213 = vmatpush1.msra.mxu0 %v1184
    %1214 = vmatprep.subr.mxu0 0.0
    %1215 = vmatpush1.msra.mxu0 %v1185
    %1216 = vmatprep.subr.mxu0 0.0
    %1217 = vmatpush1.msra.mxu0 %v1186
    %1218 = vmatprep.subr.mxu0 0.0
    %1219 = vmatpush1.msra.mxu0 %v1187
    %1220 = vmatprep.subr.mxu0 0.0
    %1221 = vmatpush1.msra.mxu0 %v1188
    %1222 = vmatprep.subr.mxu0 0.0
    %1223 = vmatpush1.msra.mxu0 %v1189
    %1224 = vmatprep.subr.mxu0 0.0
    %1225 = vmatpush1.msra.mxu0 %v1190
    %1226 = vmatprep.subr.mxu0 0.0
    %1227 = vmatpush1.msra.mxu0 %v1191
    %1228 = vmatprep.subr.mxu0 0.0
    %1229 = vmatpush1.msra.mxu0 %v1192
    %1230 = vmatprep.subr.mxu0 0.0
    %1231 = vmatpush1.msra.mxu0 %v1193
    %1232 = vmatprep.subr.mxu0 0.0
    %1233 = vmatpush1.msra.mxu0 %v1194
    %1234 = vmatprep.subr.mxu0 0.0
    %1235 = vmatpush1.msra.mxu0 %v1195
    %1236 = vmatprep.subr.mxu0 0.0
    %1237 = vmatpush1.msra.mxu0 %v1196
    %1238 = vmatprep.subr.mxu0 0.0
    %1239 = vmatpush1.msra.mxu0 %v1197
    %1240 = vmatprep.subr.mxu0 0.0
    %1241 = vmatpush1.msra.mxu0 0.0
    %1242 = vmatprep.subr.mxu0 0.0
    %1243 = vmatpush1.msra.mxu0 0.0
    %1244 = vmatprep.subr.mxu0 0.0
    %1245 = vmatpush1.msra.mxu0 0.0
    %1246 = vmatprep.subr.mxu0 0.0
    %1247 = vmatpush1.msra.mxu0 0.0
    %1248 = vmatprep.subr.mxu0 0.0
    %1249 = vmatpush1.msra.mxu0 0.0
    %1250 = vmatprep.subr.mxu0 0.0
    %1251 = vmatpush1.msra.mxu0 0.0
    %1252 = vmatprep.subr.mxu0 0.0
    %1253 = vmatpush1.msra.mxu0 0.0
    %1254 = vmatprep.subr.mxu0 0.0
    %1255 = vmatpush1.msra.mxu0 0.0
    %1256 = vmatprep.subr.mxu0 0.0
    %1257 = vmatpush1.msra.mxu0 0.0
    %1258 = vmatprep.subr.mxu0 0.0
    %1259 = vmatpush1.msra.mxu0 0.0
    %1260 = vmatprep.subr.mxu0 0.0
    %1261 = vmatpush1.msra.mxu0 0.0
    %1262 = vmatprep.subr.mxu0 0.0
    %1263 = vmatpush1.msra.mxu0 0.0
    %1264 = vmatprep.subr.mxu0 0.0
    %1265 = vmatpush1.msra.mxu0 0.0
    %1266 = vmatprep.subr.mxu0 0.0
    %1267 = vmatpush1.msra.mxu0 0.0
    %1268 = vmatprep.subr.mxu0 0.0
    %1269 = vmatpush1.msra.mxu0 0.0
    %1270 = vmatprep.subr.mxu0 0.0
    %1271 = vmatpush1.msra.mxu0 0.0
    %1272 = vmatprep.mubr.f32.mxu0 0.0
    %1273 = vmatmul.mubr.f32.gmra.mrb[0].mxu0 %v1203
    %v1274 = vpop.f32.mrb[0].mxu0
    %v1275 = vadd.f32 0.0, %v1274
    %v1276 = vpop.f32.mrb[0].mxu0
    %1277 = vmatprep.mubr.f32.mxu0 0.0
    %1278 = vmatmul.mubr.f32.gmra.mrb[0].mxu0 %v1205
    %v1279 = vpop.f32.mrb[0].mxu0
    %v1280 = vadd.f32 0.0, %v1279
    %v1281 = vpop.f32.mrb[0].mxu0
    %1282 = vdwg.mxu0
    %1283 = vmatprep.subr.mxu0 0.0
    %1284 = vmatpush1.msra.mxu0 %v1165
    %1285 = vmatprep.subr.mxu0 0.0
    %1286 = vmatpush1.msra.mxu0 %v1166
    %1287 = vmatprep.subr.mxu0 0.0
    %1288 = vmatpush1.msra.mxu0 %v1167
    %1289 = vmatprep.subr.mxu0 0.0
    %1290 = vmatpush1.msra.mxu0 %v1168
    %1291 = vmatprep.subr.mxu0 0.0
    %1292 = vmatpush1.msra.mxu0 %v1169
    %1293 = vmatprep.subr.mxu0 0.0
    %1294 = vmatpush1.msra.mxu0 %v1170
    %1295 = vmatprep.subr.mxu0 0.0
    %1296 = vmatpush1.msra.mxu0 %v1171
    %1297 = vmatprep.subr.mxu0 0.0
    %1298 = vmatpush1.msra.mxu0 %v1172
    %1299 = vmatprep.subr.mxu0 0.0
    %1300 = vmatpush1.msra.mxu0 %v1173
    %1301 = vmatprep.subr.mxu0 0.0
    %1302 = vmatpush1.msra.mxu0 %v1174
    %1303 = vmatprep.subr.mxu0 0.0
    %1304 = vmatpush1.msra.mxu0 %v1175
    %1305 = vmatprep.subr.mxu0 0.0
    %1306 = vmatpush1.msra.mxu0 %v1176
    %1307 = vmatprep.subr.mxu0 0.0
    %1308 = vmatpush1.msra.mxu0 %v1177
    %1309 = vmatprep.subr.mxu0 0.0
    %1310 = vmatpush1.msra.mxu0 %v1178
    %1311 = vmatprep.subr.mxu0 0.0
    %1312 = vmatpush1.msra.mxu0 %v1179
    %1313 = vmatprep.subr.mxu0 0.0
    %1314 = vmatpush1.msra.mxu0 %v1180
    %1315 = vmatprep.subr.mxu0 0.0
    %1316 = vmatpush1.msra.mxu0 0.0
    %1317 = vmatprep.subr.mxu0 0.0
    %1318 = vmatpush1.msra.mxu0 0.0
    %1319 = vmatprep.subr.mxu0 0.0
    %1320 = vmatpush1.msra.mxu0 0.0
    %1321 = vmatprep.subr.mxu0 0.0
    %1322 = vmatpush1.msra.mxu0 0.0
    %1323 = vmatprep.subr.mxu0 0.0
    %1324 = vmatpush1.msra.mxu0 0.0
    %1325 = vmatprep.subr.mxu0 0.0
    %1326 = vmatpush1.msra.mxu0 0.0
    %1327 = vmatprep.subr.mxu0 0.0
    %1328 = vmatpush1.msra.mxu0 0.0
    %1329 = vmatprep.subr.mxu0 0.0
    %1330 = vmatpush1.msra.mxu0 0.0
    %1331 = vmatprep.subr.mxu0 0.0
    %1332 = vmatpush1.msra.mxu0 0.0
    %1333 = vmatprep.subr.mxu0 0.0
    %1334 = vmatpush1.msra.mxu0 0.0
    %1335 = vmatprep.subr.mxu0 0.0
    %1336 = vmatpush1.msra.mxu0 0.0
    %1337 = vmatprep.subr.mxu0 0.0
    %1338 = vmatpush1.msra.mxu0 0.0
    %1339 = vmatprep.subr.mxu0 0.0
    %1340 = vmatpush1.msra.mxu0 0.0
    %1341 = vmatprep.subr.mxu0 0.0
    %1342 = vmatpush1.msra.mxu0 0.0
    %1343 = vmatprep.subr.mxu0 0.0
    %1344 = vmatpush1.msra.mxu0 0.0
    %1345 = vmatprep.subr.mxu0 0.0
    %1346 = vmatpush1.msra.mxu0 0.0
    %1347 = vmatprep.mubr.f32.mxu0 0.0
    %1348 = vmatmul.mubr.f32.gmra.mrb[0].mxu0 %v1162
    %v1349 = vpop.f32.mrb[0].mxu0
    %v1350 = vadd.f32 %v1275, %v1349
    %v1351 = vpop.f32.mrb[0].mxu0
    %1352 = vmatprep.mubr.f32.mxu0 0.0
    %1353 = vmatmul.mubr.f32.gmra.mrb[0].mxu0 %v1163
    %v1354 = vpop.f32.mrb[0].mxu0
    %v1355 = vadd.f32 %v1280, %v1354
    %v1356 = vpop.f32.mrb[0].mxu0
    %1357 = vdwg.mxu0
    %s1358 = scalar_lea.vmem [#allocation6], 256
    %v1359 = vld [vmem:[%s1358] sm:$0xff]
    %v1360 = vld [vmem:[%s1358 + $0x8] sm:$0xff]
    %v1361 = vld [vmem:[%s1358 + $0x10] sm:$0xff]
    %v1362 = vld [vmem:[%s1358 + $0x18] sm:$0xff]
    %v1363 = vld [vmem:[%s1358 + $0x20] sm:$0xff]
    %v1364 = vld [vmem:[%s1358 + $0x28] sm:$0xff]
    %v1365 = vld [vmem:[%s1358 + $0x30] sm:$0xff]
    %v1366 = vld [vmem:[%s1358 + $0x38] sm:$0xff]
    %v1367 = vld [vmem:[%s1358 + $0x40] sm:$0xff]
    %v1368 = vld [vmem:[%s1358 + $0x48] sm:$0xff]
    %v1369 = vld [vmem:[%s1358 + $0x50] sm:$0xff]
    %v1370 = vld [vmem:[%s1358 + $0x58] sm:$0xff]
    %v1371 = vld [vmem:[%s1358 + $0x60] sm:$0xff]
    %v1372 = vld [vmem:[%s1358 + $0x68] sm:$0xff]
    %v1373 = vld [vmem:[%s1358 + $0x70] sm:$0xff]
    %v1374 = vld [vmem:[%s1358 + $0x78] sm:$0xff]
    %v1375 = vrot.slane %v1162, 2
    %v1376 = vrot.slane %v1163, 2
    %v1377 = vsel %vm310, %v1375, %v1376
    %v1378 = vrot.slane %v1164, 2
    %v1379 = vsel %vm310, %v1376, %v1378
    %1382 = vmatprep.subr.mxu0 0.0
    %1383 = vmatpush1.msra.mxu0 %v1359
    %1384 = vmatprep.subr.mxu0 0.0
    %1385 = vmatpush1.msra.mxu0 %v1360
    %1386 = vmatprep.subr.mxu0 0.0
    %1387 = vmatpush1.msra.mxu0 %v1361
    %1388 = vmatprep.subr.mxu0 0.0
    %1389 = vmatpush1.msra.mxu0 %v1362
    %1390 = vmatprep.subr.mxu0 0.0
    %1391 = vmatpush1.msra.mxu0 %v1363
    %1392 = vmatprep.subr.mxu0 0.0
    %1393 = vmatpush1.msra.mxu0 %v1364
    %1394 = vmatprep.subr.mxu0 0.0
    %1395 = vmatpush1.msra.mxu0 %v1365
    %1396 = vmatprep.subr.mxu0 0.0
    %1397 = vmatpush1.msra.mxu0 %v1366
    %1398 = vmatprep.subr.mxu0 0.0
    %1399 = vmatpush1.msra.mxu0 %v1367
    %1400 = vmatprep.subr.mxu0 0.0
    %1401 = vmatpush1.msra.mxu0 %v1368
    %1402 = vmatprep.subr.mxu0 0.0
    %1403 = vmatpush1.msra.mxu0 %v1369
    %1404 = vmatprep.subr.mxu0 0.0
    %1405 = vmatpush1.msra.mxu0 %v1370
    %1406 = vmatprep.subr.mxu0 0.0
    %1407 = vmatpush1.msra.mxu0 %v1371
    %1408 = vmatprep.subr.mxu0 0.0
    %1409 = vmatpush1.msra.mxu0 %v1372
    %1410 = vmatprep.subr.mxu0 0.0
    %1411 = vmatpush1.msra.mxu0 %v1373
    %1412 = vmatprep.subr.mxu0 0.0
    %1413 = vmatpush1.msra.mxu0 %v1374
    %1414 = vmatprep.subr.mxu0 0.0
    %1415 = vmatpush1.msra.mxu0 0.0
    %1416 = vmatprep.subr.mxu0 0.0
    %1417 = vmatpush1.msra.mxu0 0.0
    %1418 = vmatprep.subr.mxu0 0.0
    %1419 = vmatpush1.msra.mxu0 0.0
    %1420 = vmatprep.subr.mxu0 0.0
    %1421 = vmatpush1.msra.mxu0 0.0
    %1422 = vmatprep.subr.mxu0 0.0
    %1423 = vmatpush1.msra.mxu0 0.0
    %1424 = vmatprep.subr.mxu0 0.0
    %1425 = vmatpush1.msra.mxu0 0.0
    %1426 = vmatprep.subr.mxu0 0.0
    %1427 = vmatpush1.msra.mxu0 0.0
    %1428 = vmatprep.subr.mxu0 0.0
    %1429 = vmatpush1.msra.mxu0 0.0
    %1430 = vmatprep.subr.mxu0 0.0
    %1431 = vmatpush1.msra.mxu0 0.0
    %1432 = vmatprep.subr.mxu0 0.0
    %1433 = vmatpush1.msra.mxu0 0.0
    %1434 = vmatprep.subr.mxu0 0.0
    %1435 = vmatpush1.msra.mxu0 0.0
    %1436 = vmatprep.subr.mxu0 0.0
    %1437 = vmatpush1.msra.mxu0 0.0
    %1438 = vmatprep.subr.mxu0 0.0
    %1439 = vmatpush1.msra.mxu0 0.0
    %1440 = vmatprep.subr.mxu0 0.0
    %1441 = vmatpush1.msra.mxu0 0.0
    %1442 = vmatprep.subr.mxu0 0.0
    %1443 = vmatpush1.msra.mxu0 0.0
    %1444 = vmatprep.subr.mxu0 0.0
    %1445 = vmatpush1.msra.mxu0 0.0
    %1446 = vmatprep.mubr.f32.mxu0 0.0
    %1447 = vmatmul.mubr.f32.gmra.mrb[0].mxu0 %v1377
    %v1448 = vpop.f32.mrb[0].mxu0
    %v1449 = vadd.f32 0.0, %v1448
    %v1450 = vpop.f32.mrb[0].mxu0
    %1451 = vmatprep.mubr.f32.mxu0 0.0
    %1452 = vmatmul.mubr.f32.gmra.mrb[0].mxu0 %v1379
    %v1453 = vpop.f32.mrb[0].mxu0
    %v1454 = vadd.f32 0.0, %v1453
    %v1455 = vpop.f32.mrb[0].mxu0
    %1456 = vdwg.mxu0
    %v1457 = vadd.f32 %v1350, %v1449
    %v1458 = vadd.f32 %v1355, %v1454
    %v1459 = vld [vmem:[%s11] sm:$0x1]
    %v1461 = vlaneseq
    %v1462 = vshrl.u32 %v1461, 7
    %v1463 = vsub.s32 0, %v1462
    %v1464 = vrot.slane %v1459, %v1463
    %v1466 = vmul.f32 %v1457, %v1464
    %v1467 = vmul.f32 %v1458, %v1464
    %v1468 = vld [vmem:[%s12] sm:$0x1]
    %v1470 = vlaneseq
    %v1471 = vshrl.u32 %v1470, 7
    %v1472 = vsub.s32 0, %v1471
    %v1473 = vrot.slane %v1468, %v1472
    %v1475 = vadd.f32 %v1466, %v1473
    %v1476 = vadd.f32 %v1467, %v1473
    %v1477 = vadd.f32 %v1475, %v1032
    %v1478 = vadd.f32 %v1476, %v1034
    %v1479 = vmax.f32 %v1477, 0.0
    %v1480 = vmax.f32 %v1478, 0.0
    %1481 = vst [vmem:[%s13] sm:$0xff] %v1479
    %1482 = vst [vmem:[%s13 + $0x8] sm:$0xff] %v1480
    // Predicated region
    $region66: #{audio_visual_resnet_stage_forward.1} parent=1 // pred_check
      _
    $region67: #{audio_visual_resnet_stage_forward.1} parent=1 // pred_check_branch
      %1484 = sbr.rel (0) target = $region69
    $region68: #{audio_visual_resnet_stage_forward.1} parent=1 // pred_region
      _
    $region69: #{audio_visual_resnet_stage_forward.1} parent=1 // pred_fallthru
      _
    // Predicated region
    $region70: #{audio_visual_resnet_stage_forward.1} parent=1 // pred_check
      _
    $region71: #{audio_visual_resnet_stage_forward.1} parent=1 // pred_check_branch
      %1486 = sbr.rel (0) target = $region73
    $region72: #{audio_visual_resnet_stage_forward.1} parent=1 // pred_region
      _
    $region73: #{audio_visual_resnet_stage_forward.1} parent=1 // pred_fallthru
      _
    %1487 = vsyncpa [#allocation3], 1
    %1488 = vsyncpa [#allocation5], 1

</llo_original>
